<compile_context>
chip_gen: v5e
topology: v5e:2x2
jax: 0.10.0
libtpu: 0.0.40
codegen_flags: <defaults>
</compile_context>

<pallas_src>
import jax
import jax.numpy as jnp
from jax.experimental import pallas as pl
from jax.experimental.pallas import tpu as pltpu

# ---- model dimensions (consistent with the module) ---------------------------
IN_DIM = 3                     # feat channels used by the Linear (x[..., :in_dim])
EMB_DIM = 32                   # emb_dim
STEPS_PER_DAY = 288            # steps_per_day
N_DOW = 7                      # days of week
OUT_DIM = 3 * EMB_DIM          # concat([feat, tod, dow]) -> 96

# fused contracting-dim layout: [feat(0..2) | tod one-hot (3..290) | dow one-hot (291..297)]
TOD_OFF = IN_DIM                           # 3
DOW_OFF = IN_DIM + STEPS_PER_DAY           # 291
K_TOT = IN_DIM + STEPS_PER_DAY + N_DOW     # 298 (logical)
K_LHS = 384                                # zero-padded to a multiple of 128 lanes (free)


def _round_up(a, b):
    return (a + b - 1) // b * b


# ---------------------------- Pallas kernel -----------------------------------
def temporal_embedding_kernel(x_ref, whi_ref, wlo_ref, wf_ref, b_ref, out_ref):
    xt = x_ref[...]                                            # (TM, 3) f32
    tm = xt.shape[0]

    # index math: (tod * steps_per_day).long() / dow.long()  (trunc toward 0)
    tod_idx = (xt[:, 1:2] * STEPS_PER_DAY).astype(jnp.int32)   # (TM, 1)
    dow_idx = xt[:, 2:3].astype(jnp.int32)                     # (TM, 1)

    # Fused lhs row:  [ feat values | one-hot(tod) | one-hot(dow) | 0-pad ]
    lane = jax.lax.broadcasted_iota(jnp.int32, (tm, K_LHS), 1)
    hot = (lane == TOD_OFF + tod_idx) | (lane == DOW_OFF + dow_idx)
    # feat values for lanes 0..2 via a short select chain (fewer full-width
    # VPU passes than the previous per-channel cmp+where+add loop).
    feat_val = jnp.where(lane == 0, xt[:, 0:1],
                         jnp.where(lane == 1, xt[:, 1:2], xt[:, 2:3]))
    comb = jnp.where(lane < IN_DIM, feat_val, hot.astype(jnp.float32))
    c_hi = comb.astype(jnp.bfloat16)        # one-hot lanes are exact in bf16

    # Two bf16 MXU matmuls (hi/lo weight split), accumulated in f32:
    acc = jnp.dot(c_hi, whi_ref[...], preferred_element_type=jnp.float32)
    acc = acc + jnp.dot(c_hi, wlo_ref[...], preferred_element_type=jnp.float32)

    # Correction for the 3 real-valued feat lanes that lost mantissa bits in
    # the bf16 cast:  (x - bf16(x)) @ W_feat, done on the VPU (K=3, 96 lanes).
    x_lo = xt - xt.astype(jnp.bfloat16).astype(jnp.float32)    # exact residual
    wf = wf_ref[...]                                           # (3, 96) f32
    corr = (x_lo[:, 0:1] * wf[0:1, :]
            + x_lo[:, 1:2] * wf[1:2, :]
            + x_lo[:, 2:3] * wf[2:3, :])

    out_ref[...] = (acc + corr + b_ref[...]).astype(out_ref.dtype)


# ------------------------------ wrapper ----------------------------------------
def temporal_embedding_forward(x, params, *, row_tile=1024, out_dtype=jnp.float32):
    B, T, N, C = x.shape
    assert C >= 3, "need channels [feat..., tod, dow]"
    M = B * T * N
    # slice to the 3 channels the kernel needs (avoids DMA of unused channels)
    x2 = x[..., :IN_DIM].reshape(M, IN_DIM).astype(jnp.float32)

    # tile rows: multiple of 8; keep >=2 grid tiles when M allows so
    # dimension_semantics=("parallel",) can use both v7x TensorCores.
    rt = max(8, min(int(row_tile), _round_up(pl.cdiv(M, 2), 8)))
    grid = (pl.cdiv(M, rt),)          # ragged tail handled by Pallas masking

    out = pl.pallas_call(
        temporal_embedding_kernel,
        out_shape=jax.ShapeDtypeStruct((M, OUT_DIM), out_dtype),
        grid_spec=pltpu.PrefetchScalarGridSpec(
            num_scalar_prefetch=0,
            grid=grid,
            in_specs=[
                pl.BlockSpec((rt, IN_DIM), lambda i: (i, 0)),
                pl.BlockSpec((K_LHS, OUT_DIM), lambda i: (0, 0)),
                pl.BlockSpec((K_LHS, OUT_DIM), lambda i: (0, 0)),
                pl.BlockSpec((IN_DIM, OUT_DIM), lambda i: (0, 0)),
                pl.BlockSpec((1, OUT_DIM), lambda i: (0, 0)),
            ],
            out_specs=pl.BlockSpec((rt, OUT_DIM), lambda i: (i, 0)),
        ),
        compiler_params=pltpu.CompilerParams(
            dimension_semantics=("parallel",),
            vmem_limit_bytes=48 * 1024 * 1024,
        ),
    )(x2, params["w_hi"], params["w_lo"], params["w_feat_rows"], params["b_big"])
    return out.reshape(B, T, N, OUT_DIM)


# --------------------- deterministic parameter init ----------------------------
def init_params(key):
    k1, k2, k3, k4 = jax.random.split(key, 4)
    lim = 1.0 / (IN_DIM ** 0.5)
    w_feat = jax.random.uniform(k1, (EMB_DIM, IN_DIM), jnp.float32, -lim, lim)
    b_feat = jax.random.uniform(k2, (EMB_DIM,), jnp.float32, -lim, lim)
    tod_tab = jax.random.normal(k3, (STEPS_PER_DAY, EMB_DIM), jnp.float32)
    dow_tab = jax.random.normal(k4, (N_DOW, EMB_DIM), jnp.float32)

    # Fused, pre-transposed block-diagonal weight (K zero-padded to 384 lanes).
    w_big = jnp.zeros((K_LHS, OUT_DIM), jnp.float32)
    w_big = w_big.at[:IN_DIM, :EMB_DIM].set(w_feat.T)
    w_big = w_big.at[TOD_OFF:TOD_OFF + STEPS_PER_DAY, EMB_DIM:2 * EMB_DIM].set(tod_tab)
    w_big = w_big.at[DOW_OFF:DOW_OFF + N_DOW, 2 * EMB_DIM:].set(dow_tab)

    # bf16 hi/lo split (built once on host); hi+lo reconstructs w_big to ~4e-6.
    w_hi = w_big.astype(jnp.bfloat16)
    w_lo = (w_big - w_hi.astype(jnp.float32)).astype(jnp.bfloat16)
    w_feat_rows = w_big[:IN_DIM, :]                      # (3, 96) f32, exact feat rows
    b_big = jnp.concatenate(
        [b_feat, jnp.zeros((2 * EMB_DIM,), jnp.float32)]).reshape(1, OUT_DIM)

    return {"w_feat": w_feat, "b_feat": b_feat,
            "tod_tab": tod_tab, "dow_tab": dow_tab,
            "w_hi": w_hi, "w_lo": w_lo,
            "w_feat_rows": w_feat_rows, "b_big": b_big}


# ------------------------ pure-JAX reference ------------------------------------
def ref_temporal_embedding(x, p):
    feat = x[..., :IN_DIM]
    tod = x[..., 1]
    dow = x[..., 2]
    feat_emb = jnp.einsum("...i,ei->...e", feat, p["w_feat"],
                          precision=jax.lax.Precision.HIGHEST) + p["b_feat"]
    tod_emb = p["tod_tab"][(tod * STEPS_PER_DAY).astype(jnp.int32)]
    dow_emb = p["dow_tab"][dow.astype(jnp.int32)]
    return jnp.concatenate([feat_emb, tod_emb, dow_emb], axis=-1)


# --------------------------------- main ------------------------------------------
if __name__ == "__main__":
    key = jax.random.PRNGKey(0)
    kp, kv, kt, kd = jax.random.split(key, 4)
    params = init_params(kp)

    # x layout: (batch, seq, nodes, channels=[value, tod, dow])
    B, T, N = 2, 8, 16
    val = jax.random.normal(kv, (B, T, N, 1), jnp.float32)
    tod_i = jax.random.randint(kt, (B, T, N, 1), 0, STEPS_PER_DAY)
    dow_i = jax.random.randint(kd, (B, T, N, 1), 0, N_DOW)
    x = jnp.concatenate(
        [val,
         (tod_i.astype(jnp.float32) + 0.5) / STEPS_PER_DAY,   # tod fraction
         dow_i.astype(jnp.float32)],                          # dow index
        axis=-1)

    out = temporal_embedding_forward(x, params)
    out = jax.block_until_ready(out)

    ref = ref_temporal_embedding(x, params)
    assert out.shape == (B, T, N, OUT_DIM)
    err = float(jnp.max(jnp.abs(out - ref)))
    assert jnp.allclose(out, ref, atol=1e-4, rtol=1e-4), f"max abs err {err}"
    print("KERNEL_OK")
</pallas_src>

<mosaic_0001>
module attributes {stable_mosaic.version = 11 : i64} {
  func.func @temporal_embedding_kernel(%arg0: i32, %arg1: memref<128x3xf32, #tpu.memory_space<vmem>>, %arg2: memref<384x96xbf16, #tpu.memory_space<vmem>>, %arg3: memref<384x96xbf16, #tpu.memory_space<vmem>>, %arg4: memref<3x96xf32, #tpu.memory_space<vmem>>, %arg5: memref<1x96xf32, #tpu.memory_space<vmem>>, %arg6: memref<128x96xf32, #tpu.memory_space<vmem>>) attributes {dimension_semantics = [#tpu.dimension_semantics<parallel>], iteration_bounds = array<i64: 2>, scalar_prefetch = 0 : i64, scratch_operands = 0 : i64, tpu.core_type = #tpu.core_type<tc>, window_params = [{transform_indices = @transform_0, window_bounds = array<i64: 128, 3>}, {pipeline_mode = #tpu.pipeline_mode<synchronous>, transform_indices = @transform_1, window_bounds = array<i64: 384, 96>}, {pipeline_mode = #tpu.pipeline_mode<synchronous>, transform_indices = @transform_2, window_bounds = array<i64: 384, 96>}, {pipeline_mode = #tpu.pipeline_mode<synchronous>, transform_indices = @transform_3, window_bounds = array<i64: 3, 96>}, {pipeline_mode = #tpu.pipeline_mode<synchronous>, transform_indices = @transform_4, window_bounds = array<i64: 1, 96>}, {transform_indices = @transform_5, window_bounds = array<i64: 128, 96>}]} {
    %c0 = arith.constant 0 : index
    %c0_0 = arith.constant 0 : index
    %0 = vector.load %arg1[%c0, %c0_0] : memref<128x3xf32, #tpu.memory_space<vmem>>, vector<128x3xf32>
    %1 = vector.extract_strided_slice %0 {offsets = [0, 1], sizes = [128, 1], strides = [1, 1]} : vector<128x3xf32> to vector<128x1xf32>
    %cst = arith.constant 2.880000e+02 : f32
    %2 = vector.broadcast %cst : f32 to vector<128x1xf32>
    %3 = arith.mulf %1, %2 : vector<128x1xf32>
    %4 = arith.fptosi %3 : vector<128x1xf32> to vector<128x1xi32>
    %5 = vector.extract_strided_slice %0 {offsets = [0, 2], sizes = [128, 1], strides = [1, 1]} : vector<128x3xf32> to vector<128x1xf32>
    %6 = arith.fptosi %5 : vector<128x1xf32> to vector<128x1xi32>
    %7 = tpu.iota {dimensions = array<i32: 1>} : vector<128x384xi32>
    %c3_i32 = arith.constant 3 : i32
    %8 = vector.broadcast %c3_i32 : i32 to vector<128x1xi32>
    %9 = arith.addi %8, %4 : vector<128x1xi32>
    %10 = vector.broadcast %9 : vector<128x1xi32> to vector<128x384xi32>
    %11 = arith.cmpi eq, %7, %10 : vector<128x384xi32>
    %c291_i32 = arith.constant 291 : i32
    %12 = vector.broadcast %c291_i32 : i32 to vector<128x1xi32>
    %13 = arith.addi %12, %6 : vector<128x1xi32>
    %14 = vector.broadcast %13 : vector<128x1xi32> to vector<128x384xi32>
    %15 = arith.cmpi eq, %7, %14 : vector<128x384xi32>
    %16 = arith.ori %11, %15 : vector<128x384xi1>
    %c0_i32 = arith.constant 0 : i32
    %17 = vector.broadcast %c0_i32 : i32 to vector<128x384xi32>
    %18 = arith.cmpi eq, %7, %17 : vector<128x384xi32>
    %19 = vector.extract_strided_slice %0 {offsets = [0, 0], sizes = [128, 1], strides = [1, 1]} : vector<128x3xf32> to vector<128x1xf32>
    %c1_i32 = arith.constant 1 : i32
    %20 = vector.broadcast %c1_i32 : i32 to vector<128x384xi32>
    %21 = arith.cmpi eq, %7, %20 : vector<128x384xi32>
    %22 = vector.extract_strided_slice %0 {offsets = [0, 1], sizes = [128, 1], strides = [1, 1]} : vector<128x3xf32> to vector<128x1xf32>
    %23 = vector.extract_strided_slice %0 {offsets = [0, 2], sizes = [128, 1], strides = [1, 1]} : vector<128x3xf32> to vector<128x1xf32>
    %24 = vector.shape_cast %22 : vector<128x1xf32> to vector<128x1xf32>
    %25 = vector.broadcast %24 : vector<128x1xf32> to vector<128x384xf32>
    %26 = vector.shape_cast %23 : vector<128x1xf32> to vector<128x1xf32>
    %27 = vector.broadcast %26 : vector<128x1xf32> to vector<128x384xf32>
    %28 = arith.select %21, %25, %27 : vector<128x384xi1>, vector<128x384xf32>
    %29 = vector.shape_cast %19 : vector<128x1xf32> to vector<128x1xf32>
    %30 = vector.broadcast %29 : vector<128x1xf32> to vector<128x384xf32>
    %31 = arith.select %18, %30, %28 : vector<128x384xi1>, vector<128x384xf32>
    %c3_i32_1 = arith.constant 3 : i32
    %32 = vector.broadcast %c3_i32_1 : i32 to vector<128x384xi32>
    %33 = arith.cmpi slt, %7, %32 : vector<128x384xi32>
    %34 = arith.extui %16 : vector<128x384xi1> to vector<128x384xi32>
    %35 = arith.sitofp %34 : vector<128x384xi32> to vector<128x384xf32>
    %36 = arith.select %33, %31, %35 : vector<128x384xi1>, vector<128x384xf32>
    %37 = arith.truncf %36 : vector<128x384xf32> to vector<128x384xbf16>
    %c0_2 = arith.constant 0 : index
    %c0_3 = arith.constant 0 : index
    %38 = vector.load %arg2[%c0_2, %c0_3] : memref<384x96xbf16, #tpu.memory_space<vmem>>, vector<384x96xbf16>
    %cst_4 = arith.constant dense<0.000000e+00> : vector<128x96xf32>
    %39 = tpu.matmul %37, %38, %cst_4 {dimension_numbers = #tpu.dot_dimension_numbers<[1], [0], [0], [1], [0, 0, 1, 1], [], []>} : vector<128x384xbf16>, vector<384x96xbf16>, vector<128x96xf32> -> vector<128x96xf32>
    %c0_5 = arith.constant 0 : index
    %c0_6 = arith.constant 0 : index
    %40 = vector.load %arg3[%c0_5, %c0_6] : memref<384x96xbf16, #tpu.memory_space<vmem>>, vector<384x96xbf16>
    %cst_7 = arith.constant dense<0.000000e+00> : vector<128x96xf32>
    %41 = tpu.matmul %37, %40, %cst_7 {dimension_numbers = #tpu.dot_dimension_numbers<[1], [0], [0], [1], [0, 0, 1, 1], [], []>} : vector<128x384xbf16>, vector<384x96xbf16>, vector<128x96xf32> -> vector<128x96xf32>
    %42 = arith.addf %39, %41 : vector<128x96xf32>
    %43 = arith.truncf %0 : vector<128x3xf32> to vector<128x3xbf16>
    %44 = arith.extf %43 : vector<128x3xbf16> to vector<128x3xf32>
    %45 = arith.subf %0, %44 : vector<128x3xf32>
    %c0_8 = arith.constant 0 : index
    %c0_9 = arith.constant 0 : index
    %46 = vector.load %arg4[%c0_8, %c0_9] : memref<3x96xf32, #tpu.memory_space<vmem>>, vector<3x96xf32>
    %47 = vector.extract_strided_slice %45 {offsets = [0, 0], sizes = [128, 1], strides = [1, 1]} : vector<128x3xf32> to vector<128x1xf32>
    %48 = vector.extract_strided_slice %46 {offsets = [0, 0], sizes = [1, 96], strides = [1, 1]} : vector<3x96xf32> to vector<1x96xf32>
    %49 = vector.broadcast %47 : vector<128x1xf32> to vector<128x96xf32>
    %50 = vector.broadcast %48 : vector<1x96xf32> to vector<128x96xf32>
    %51 = arith.mulf %49, %50 : vector<128x96xf32>
    %52 = vector.extract_strided_slice %45 {offsets = [0, 1], sizes = [128, 1], strides = [1, 1]} : vector<128x3xf32> to vector<128x1xf32>
    %53 = vector.extract_strided_slice %46 {offsets = [1, 0], sizes = [1, 96], strides = [1, 1]} : vector<3x96xf32> to vector<1x96xf32>
    %54 = vector.broadcast %52 : vector<128x1xf32> to vector<128x96xf32>
    %55 = vector.broadcast %53 : vector<1x96xf32> to vector<128x96xf32>
    %56 = arith.mulf %54, %55 : vector<128x96xf32>
    %57 = arith.addf %51, %56 : vector<128x96xf32>
    %58 = vector.extract_strided_slice %45 {offsets = [0, 2], sizes = [128, 1], strides = [1, 1]} : vector<128x3xf32> to vector<128x1xf32>
    %59 = vector.extract_strided_slice %46 {offsets = [2, 0], sizes = [1, 96], strides = [1, 1]} : vector<3x96xf32> to vector<1x96xf32>
    %60 = vector.broadcast %58 : vector<128x1xf32> to vector<128x96xf32>
    %61 = vector.broadcast %59 : vector<1x96xf32> to vector<128x96xf32>
    %62 = arith.mulf %60, %61 : vector<128x96xf32>
    %63 = arith.addf %57, %62 : vector<128x96xf32>
    %64 = arith.addf %42, %63 : vector<128x96xf32>
    %c0_10 = arith.constant 0 : index
    %c0_11 = arith.constant 0 : index
    %65 = vector.load %arg5[%c0_10, %c0_11] : memref<1x96xf32, #tpu.memory_space<vmem>>, vector<1x96xf32>
    %66 = vector.broadcast %65 : vector<1x96xf32> to vector<128x96xf32>
    %67 = arith.addf %64, %66 : vector<128x96xf32>
    %c0_12 = arith.constant 0 : index
    %c0_13 = arith.constant 0 : index
    %68 = vector.load %arg6[%c0_12, %c0_13] : memref<128x96xf32, #tpu.memory_space<vmem>>, vector<128x96xf32>
    tpu.vector_store %arg6[%c0_12, %c0_13], %67 {strides = array<i32>} : memref<128x96xf32, #tpu.memory_space<vmem>>, vector<128x96xf32>,
    return
  }
  func.func @transform_0(%arg0: i32) -> (i32, i32) {
    %c0_i32 = arith.constant 0 : i32
    %c0_i32_0 = arith.constant 0 : i32
    return %arg0, %c0_i32 : i32, i32
  }
  func.func @transform_1(%arg0: i32) -> (i32, i32) {
    %c0_i32 = arith.constant 0 : i32
    %c0_i32_0 = arith.constant 0 : i32
    %c0_i32_1 = arith.constant 0 : i32
    return %c0_i32, %c0_i32_0 : i32, i32
  }
  func.func @transform_2(%arg0: i32) -> (i32, i32) {
    %c0_i32 = arith.constant 0 : i32
    %c0_i32_0 = arith.constant 0 : i32
    %c0_i32_1 = arith.constant 0 : i32
    return %c0_i32, %c0_i32_0 : i32, i32
  }
  func.func @transform_3(%arg0: i32) -> (i32, i32) {
    %c0_i32 = arith.constant 0 : i32
    %c0_i32_0 = arith.constant 0 : i32
    %c0_i32_1 = arith.constant 0 : i32
    return %c0_i32, %c0_i32_0 : i32, i32
  }
  func.func @transform_4(%arg0: i32) -> (i32, i32) {
    %c0_i32 = arith.constant 0 : i32
    %c0_i32_0 = arith.constant 0 : i32
    %c0_i32_1 = arith.constant 0 : i32
    return %c0_i32, %c0_i32_0 : i32, i32
  }
  func.func @transform_5(%arg0: i32) -> (i32, i32) {
    %c0_i32 = arith.constant 0 : i32
    %c0_i32_0 = arith.constant 0 : i32
    return %arg0, %c0_i32 : i32, i32
  }
}

</mosaic_0001>

<llo_original>
// kernel: tpu_custom_call.1
$region0: #{tpu_custom_call.1}
  #allocation0 [shape = 'u32[]', space=smem, size = 0x4, offset = 0x4, fixed_abs, tag = 'smem constant byte address 0x4 - core index']
  #allocation1 [shape = 'u32[72,128]{1,0:T(1,128)}', space=vmem, size = 0x9000, scoped, tag = 'internal scratch']
  %s0 = inlined_call_operand.vmem [shape: f32[256,3], index: 0, kind: input, shape index: {}]
  %s1 = inlined_call_operand.vmem [shape: bf16[384,96], index: 1, kind: input, shape index: {}]
  %s2 = inlined_call_operand.vmem [shape: bf16[384,96], index: 2, kind: input, shape index: {}]
  %s3 = inlined_call_operand.vmem [shape: f32[3,96], index: 3, kind: input, shape index: {}]
  %s4 = inlined_call_operand.vmem [shape: f32[1,96], index: 4, kind: input, shape index: {}]
  %s5 = inlined_call_operand.vmem [shape: f32[256,96], index: 5, kind: output, shape index: {}]
  %s6 = sld [smem:[#allocation0]]
  $region53: #{tpu_custom_call.1} parent=0
    _
  %s8 = ssub.s32 1, %s6
  %s9 = scalar_select 0, %s8, %s6
  loop: start=0, step=1, limit=4
  $region2: #{tpu_custom_call.1} parent=0 // loop_pre_header
    _
  $region3: #{tpu_custom_call.1} parent=0 // loop_header
    %s11 = sphi 0, %s15
    %p12 = scmp.ge.s32.totalorder %s11, 4
    %s21 = sphi 0, %s23
    %s24 = sphi 0, %s21
    %s25 = sphi 0, %s24
    %s41 = sphi 0, %s25
    %s45 = sphi 0, %s45
    %s47 = sphi 0, %s45
    %s48 = sphi 0, %s47
    %s62 = sphi 0, %s48
    %s66 = sphi 0, %s66
    %s68 = sphi 0, %s66
    %s69 = sphi 0, %s68
    %s83 = sphi 0, %s69
    %s87 = sphi 0, %s87
    %s89 = sphi 0, %s87
    %s90 = sphi 0, %s89
    %s104 = sphi 0, %s90
    %s108 = sphi 0, %s108
    %s110 = sphi 0, %s108
    %s111 = sphi 0, %s110
    %s125 = sphi 0, %s111
    %s131 = sphi 0, %s133
    %s134 = sphi 0, %s131
    %s135 = sphi 0, %s134
    %s151 = sphi 0, %s135
  $region4: #{tpu_custom_call.1} parent=0 // loop_header_branch
    %14 = sbr.rel (%p12) target = $region8
  $region5: #{tpu_custom_call.1} parent=0 // loop_body
    %s16 = ssub.s32 %s11, 1
    %s17 = ssub.s32 %s11, 2
    %s18 = sadd.s32 %s11, 1
    %s19 = ssub.s32 %s11, %s18
    %p20 = scmp.eq.s32.totalorder %s19, 0
    %s22 = sadd.s32 %s21, 1
    %s23 = scalar_select %p20, %s21, %s22
    %p26 = pneg %p20
    %p27 = scmp.eq.s32.totalorder %s11, 1
    %p28 = por %p26, %p27
    %p29 = scmp.ne.s32.totalorder %s21, %s24
    %p30 = scmp.eq.s32.totalorder %s11, 0
    %p31 = por %p29, %p30
    %p32 = scmp.ne.s32.totalorder %s21, %s24
    %p33 = scmp.eq.s32.totalorder %s16, 1
    %p34 = por %p32, %p33
    %p35 = scmp.ne.s32.totalorder %s24, %s25
    %p36 = scmp.eq.s32.totalorder %s16, 0
    %p37 = por %p35, %p36
    %p38 = scmp.ne.s32.totalorder %s24, %s25
    %p39 = scmp.eq.s32.totalorder %s17, 1
    %p40 = por %p38, %p39
    %p42 = scmp.ne.s32.totalorder %s25, %s41
    %p43 = scmp.eq.s32.totalorder %s17, 0
    %p44 = por %p42, %p43
    %s46 = sadd.s32 %s45, 1
    %p49 = scmp.eq.s32.totalorder %s11, 1
    %p50 = scmp.ne.s32.totalorder %s45, %s47
    %p51 = scmp.eq.s32.totalorder %s11, 0
    %p52 = por %p50, %p51
    %p53 = scmp.ne.s32.totalorder %s45, %s47
    %p54 = scmp.eq.s32.totalorder %s16, 1
    %p55 = por %p53, %p54
    %p56 = scmp.ne.s32.totalorder %s47, %s48
    %p57 = scmp.eq.s32.totalorder %s16, 0
    %p58 = por %p56, %p57
    %p59 = scmp.ne.s32.totalorder %s47, %s48
    %p60 = scmp.eq.s32.totalorder %s17, 1
    %p61 = por %p59, %p60
    %p63 = scmp.ne.s32.totalorder %s48, %s62
    %p64 = scmp.eq.s32.totalorder %s17, 0
    %p65 = por %p63, %p64
    %s67 = sadd.s32 %s66, 1
    %p70 = scmp.eq.s32.totalorder %s11, 1
    %p71 = scmp.ne.s32.totalorder %s66, %s68
    %p72 = scmp.eq.s32.totalorder %s11, 0
    %p73 = por %p71, %p72
    %p74 = scmp.ne.s32.totalorder %s66, %s68
    %p75 = scmp.eq.s32.totalorder %s16, 1
    %p76 = por %p74, %p75
    %p77 = scmp.ne.s32.totalorder %s68, %s69
    %p78 = scmp.eq.s32.totalorder %s16, 0
    %p79 = por %p77, %p78
    %p80 = scmp.ne.s32.totalorder %s68, %s69
    %p81 = scmp.eq.s32.totalorder %s17, 1
    %p82 = por %p80, %p81
    %p84 = scmp.ne.s32.totalorder %s69, %s83
    %p85 = scmp.eq.s32.totalorder %s17, 0
    %p86 = por %p84, %p85
    %s88 = sadd.s32 %s87, 1
    %p91 = scmp.eq.s32.totalorder %s11, 1
    %p92 = scmp.ne.s32.totalorder %s87, %s89
    %p93 = scmp.eq.s32.totalorder %s11, 0
    %p94 = por %p92, %p93
    %p95 = scmp.ne.s32.totalorder %s87, %s89
    %p96 = scmp.eq.s32.totalorder %s16, 1
    %p97 = por %p95, %p96
    %p98 = scmp.ne.s32.totalorder %s89, %s90
    %p99 = scmp.eq.s32.totalorder %s16, 0
    %p100 = por %p98, %p99
    %p101 = scmp.ne.s32.totalorder %s89, %s90
    %p102 = scmp.eq.s32.totalorder %s17, 1
    %p103 = por %p101, %p102
    %p105 = scmp.ne.s32.totalorder %s90, %s104
    %p106 = scmp.eq.s32.totalorder %s17, 0
    %p107 = por %p105, %p106
    %s109 = sadd.s32 %s108, 1
    %p112 = scmp.eq.s32.totalorder %s11, 1
    %p113 = scmp.ne.s32.totalorder %s108, %s110
    %p114 = scmp.eq.s32.totalorder %s11, 0
    %p115 = por %p113, %p114
    %p116 = scmp.ne.s32.totalorder %s108, %s110
    %p117 = scmp.eq.s32.totalorder %s16, 1
    %p118 = por %p116, %p117
    %p119 = scmp.ne.s32.totalorder %s110, %s111
    %p120 = scmp.eq.s32.totalorder %s16, 0
    %p121 = por %p119, %p120
    %p122 = scmp.ne.s32.totalorder %s110, %s111
    %p123 = scmp.eq.s32.totalorder %s17, 1
    %p124 = por %p122, %p123
    %p126 = scmp.ne.s32.totalorder %s111, %s125
    %p127 = scmp.eq.s32.totalorder %s17, 0
    %p128 = por %p126, %p127
    %s129 = ssub.s32 %s11, %s18
    %p130 = scmp.eq.s32.totalorder %s129, 0
    %s132 = sadd.s32 %s131, 1
    %s133 = scalar_select %p130, %s131, %s132
    %p136 = pneg %p130
    %p137 = scmp.eq.s32.totalorder %s11, 1
    %p138 = por %p136, %p137
    %p139 = scmp.ne.s32.totalorder %s131, %s134
    %p140 = scmp.eq.s32.totalorder %s11, 0
    %p141 = por %p139, %p140
    %p142 = scmp.ne.s32.totalorder %s131, %s134
    %p143 = scmp.eq.s32.totalorder %s16, 1
    %p144 = por %p142, %p143
    %p145 = scmp.ne.s32.totalorder %s134, %s135
    %p146 = scmp.eq.s32.totalorder %s16, 0
    %p147 = por %p145, %p146
    %p148 = scmp.ne.s32.totalorder %s134, %s135
    %p149 = scmp.eq.s32.totalorder %s17, 1
    %p150 = por %p148, %p149
    %p152 = scmp.ne.s32.totalorder %s135, %s151
    %p153 = scmp.eq.s32.totalorder %s17, 0
    %p154 = por %p152, %p153
    %p155 = scmp.le.s32.totalorder 1, %s11
    %p156 = scmp.lt.s32.totalorder %s11, 3
    %p157 = pnand %p155, %p156
    %p158 = pneg %p157
    // Predicated region
    $region9: #{tpu_custom_call.1} parent=5 // pred_check
      _
    $region10: #{tpu_custom_call.1} parent=5 // pred_check_branch
      %160 = sbr.rel (%p157) target = $region12
    $region11: #{tpu_custom_call.1} parent=5 // pred_region
      %s161 = ssub.s32 %s11, 1
      // Predicated region
      $region13: #{tpu_custom_call.1} parent=11 // pred_check
        %p162 = pneg %p58
      $region14: #{tpu_custom_call.1} parent=11 // pred_check_branch
        %164 = sbr.rel (%p162) target = $region16
      $region15: #{tpu_custom_call.1} parent=11 // pred_region
        _
      $region16: #{tpu_custom_call.1} parent=11 // pred_fallthru
        _
      // Predicated region
      $region17: #{tpu_custom_call.1} parent=11 // pred_check
        %p165 = pneg %p79
      $region18: #{tpu_custom_call.1} parent=11 // pred_check_branch
        %167 = sbr.rel (%p165) target = $region20
      $region19: #{tpu_custom_call.1} parent=11 // pred_region
        _
      $region20: #{tpu_custom_call.1} parent=11 // pred_fallthru
        _
      // Predicated region
      $region21: #{tpu_custom_call.1} parent=11 // pred_check
        %p168 = pneg %p100
      $region22: #{tpu_custom_call.1} parent=11 // pred_check_branch
        %170 = sbr.rel (%p168) target = $region24
      $region23: #{tpu_custom_call.1} parent=11 // pred_region
        _
      $region24: #{tpu_custom_call.1} parent=11 // pred_fallthru
        _
      // Predicated region
      $region25: #{tpu_custom_call.1} parent=11 // pred_check
        %p171 = pneg %p121
      $region26: #{tpu_custom_call.1} parent=11 // pred_check_branch
        %173 = sbr.rel (%p171) target = $region28
      $region27: #{tpu_custom_call.1} parent=11 // pred_region
        _
      $region28: #{tpu_custom_call.1} parent=11 // pred_fallthru
        _
    $region12: #{tpu_custom_call.1} parent=5 // pred_fallthru
      _
    %p174 = scmp.lt.s32.totalorder %s11, 2
    // Predicated region
    $region29: #{tpu_custom_call.1} parent=5 // pred_check
      %p175 = pneg %p174
    $region30: #{tpu_custom_call.1} parent=5 // pred_check_branch
      %177 = sbr.rel (%p175) target = $region32
    $region31: #{tpu_custom_call.1} parent=5 // pred_region
      // Predicated region
      $region33: #{tpu_custom_call.1} parent=31 // pred_check
        %p178 = pneg %p31
      $region34: #{tpu_custom_call.1} parent=31 // pred_check_branch
        %180 = sbr.rel (%p178) target = $region36
      $region35: #{tpu_custom_call.1} parent=31 // pred_region
        %s181 = smul.u32 16, %s11
        %p182 = scmp.lt.s32.totalorder %s181, 31
        %s183 = scalar_select %p182, %s181, 31
        %s184 = smul.addr %s183, 8
        %s185 = scalar_lea.vmem %s0, %s184
        %s186 = smul.u32 16, %s11
      $region36: #{tpu_custom_call.1} parent=31 // pred_fallthru
        _
    $region32: #{tpu_custom_call.1} parent=5 // pred_fallthru
      _
    %p187 = scmp.le.s32.totalorder 1, %s11
    %p188 = scmp.lt.s32.totalorder %s11, 3
    %p189 = pnand %p187, %p188
    %p190 = pneg %p189
    // Predicated region
    $region37: #{tpu_custom_call.1} parent=5 // pred_check
      _
    $region38: #{tpu_custom_call.1} parent=5 // pred_check_branch
      %192 = sbr.rel (%p189) target = $region40
    $region39: #{tpu_custom_call.1} parent=5 // pred_region
      %s193 = ssub.s32 %s11, 1
      %s194 = smul.u32 16, %s16
      %p195 = scmp.lt.s32.totalorder %s194, 31
      %s196 = scalar_select %p195, %s194, 31
      %s197 = smul.addr %s196, 8
      %s198 = scalar_lea.vmem %s0, %s197
      %p199 = pneg %p37
      %p200 = pneg %p34
      %p201 = pneg %p58
      %p202 = pneg %p55
      %p203 = pneg %p79
      %p204 = pneg %p76
      %p205 = pneg %p100
      %p206 = pneg %p97
      %p207 = pneg %p121
      %p208 = pneg %p118
      %p209 = pneg %p147
      %p210 = pneg %p144
      %s211 = smul.u32 16, %s16
      %p212 = scmp.lt.s32.totalorder %s211, 31
      %s213 = scalar_select %p212, %s211, 31
      %s214 = smul.addr %s213, 8
      %s215 = scalar_lea.vmem %s5, %s214
      %s216 = smul.u32 16, %s16
      %p217 = scmp.lt.s32.totalorder %s216, 31
      %s218 = scalar_select %p217, %s216, 31
      %s219 = smul.addr %s218, 8
      %s220 = scalar_lea.vmem %s0, %s219
      %s221 = smul.u32 16, %s16
      %s222 = smul.u32 16, %s16
      %p223 = scmp.lt.s32.totalorder %s222, 31
      %s224 = scalar_select %p223, %s222, 31
      %s225 = smul.addr %s224, 8
      %s226 = scalar_lea.vmem %s5, %s225
      %s227 = smul.u32 16, %s16
      %v228 = vld [vmem:[%s220] sm:$0xff]
      %v229 = vld [vmem:[%s220 + $0x8] sm:$0xff]
      %v230 = vld [vmem:[%s220 + $0x10] sm:$0xff]
      %v231 = vld [vmem:[%s220 + $0x18] sm:$0xff]
      %v232 = vld [vmem:[%s220 + $0x20] sm:$0xff]
      %v233 = vld [vmem:[%s220 + $0x28] sm:$0xff]
      %v234 = vld [vmem:[%s220 + $0x30] sm:$0xff]
      %v235 = vld [vmem:[%s220 + $0x38] sm:$0xff]
      %v236 = vld [vmem:[%s220 + $0x40] sm:$0xff]
      %v237 = vld [vmem:[%s220 + $0x48] sm:$0xff]
      %v238 = vld [vmem:[%s220 + $0x50] sm:$0xff]
      %v239 = vld [vmem:[%s220 + $0x58] sm:$0xff]
      %v240 = vld [vmem:[%s220 + $0x60] sm:$0xff]
      %v241 = vld [vmem:[%s220 + $0x68] sm:$0xff]
      %v242 = vld [vmem:[%s220 + $0x70] sm:$0xff]
      %v243 = vld [vmem:[%s220 + $0x78] sm:$0xff]
      %v244 = vmul.f32 %v228, 288.0
      %v245 = vmul.f32 %v229, 288.0
      %v246 = vmul.f32 %v230, 288.0
      %v247 = vmul.f32 %v231, 288.0
      %v248 = vmul.f32 %v232, 288.0
      %v249 = vmul.f32 %v233, 288.0
      %v250 = vmul.f32 %v234, 288.0
      %v251 = vmul.f32 %v235, 288.0
      %v252 = vmul.f32 %v236, 288.0
      %v253 = vmul.f32 %v237, 288.0
      %v254 = vmul.f32 %v238, 288.0
      %v255 = vmul.f32 %v239, 288.0
      %v256 = vmul.f32 %v240, 288.0
      %v257 = vmul.f32 %v241, 288.0
      %v258 = vmul.f32 %v242, 288.0
      %v259 = vmul.f32 %v243, 288.0
      %v260 = vcvt.f32.s32.to.zero.pseudo %v244
      %v261 = vcvt.f32.s32.to.zero.pseudo %v245
      %v262 = vcvt.f32.s32.to.zero.pseudo %v246
      %v263 = vcvt.f32.s32.to.zero.pseudo %v247
      %v264 = vcvt.f32.s32.to.zero.pseudo %v248
      %v265 = vcvt.f32.s32.to.zero.pseudo %v249
      %v266 = vcvt.f32.s32.to.zero.pseudo %v250
      %v267 = vcvt.f32.s32.to.zero.pseudo %v251
      %v268 = vcvt.f32.s32.to.zero.pseudo %v252
      %v269 = vcvt.f32.s32.to.zero.pseudo %v253
      %v270 = vcvt.f32.s32.to.zero.pseudo %v254
      %v271 = vcvt.f32.s32.to.zero.pseudo %v255
      %v272 = vcvt.f32.s32.to.zero.pseudo %v256
      %v273 = vcvt.f32.s32.to.zero.pseudo %v257
      %v274 = vcvt.f32.s32.to.zero.pseudo %v258
      %v275 = vcvt.f32.s32.to.zero.pseudo %v259
      %v276 = vcvt.f32.s32.to.zero.pseudo %v228
      %v277 = vcvt.f32.s32.to.zero.pseudo %v229
      %v278 = vcvt.f32.s32.to.zero.pseudo %v230
      %v279 = vcvt.f32.s32.to.zero.pseudo %v231
      %v280 = vcvt.f32.s32.to.zero.pseudo %v232
      %v281 = vcvt.f32.s32.to.zero.pseudo %v233
      %v282 = vcvt.f32.s32.to.zero.pseudo %v234
      %v283 = vcvt.f32.s32.to.zero.pseudo %v235
      %v284 = vcvt.f32.s32.to.zero.pseudo %v236
      %v285 = vcvt.f32.s32.to.zero.pseudo %v237
      %v286 = vcvt.f32.s32.to.zero.pseudo %v238
      %v287 = vcvt.f32.s32.to.zero.pseudo %v239
      %v288 = vcvt.f32.s32.to.zero.pseudo %v240
      %v289 = vcvt.f32.s32.to.zero.pseudo %v241
      %v290 = vcvt.f32.s32.to.zero.pseudo %v242
      %v291 = vcvt.f32.s32.to.zero.pseudo %v243
      %v292 = vlaneseq
      %v293 = vand.u32 %v292, 127
      %v294 = vadd.s32 %v293, 128
      %v295 = vadd.s32 %v293, 256
      %v296 = vadd.s32 %v260, 3
      %v297 = vadd.s32 %v261, 3
      %v298 = vadd.s32 %v262, 3
      %v299 = vadd.s32 %v263, 3
      %v300 = vadd.s32 %v264, 3
      %v301 = vadd.s32 %v265, 3
      %v302 = vadd.s32 %v266, 3
      %v303 = vadd.s32 %v267, 3
      %v304 = vadd.s32 %v268, 3
      %v305 = vadd.s32 %v269, 3
      %v306 = vadd.s32 %v270, 3
      %v307 = vadd.s32 %v271, 3
      %v308 = vadd.s32 %v272, 3
      %v309 = vadd.s32 %v273, 3
      %v310 = vadd.s32 %v274, 3
      %v311 = vadd.s32 %v275, 3
      %312 = vset.pattern.permute.xlu0 1
      %313 = vperm.xlu0 %312, %v296
      %v314 = vpop.permute.xlu0 %313
      %315 = vset.pattern.permute.xlu0 1
      %316 = vperm.xlu0 %315, %v297
      %v317 = vpop.permute.xlu0 %316
      %318 = vset.pattern.permute.xlu0 1
      %319 = vperm.xlu0 %318, %v298
      %v320 = vpop.permute.xlu0 %319
      %321 = vset.pattern.permute.xlu0 1
      %322 = vperm.xlu0 %321, %v299
      %v323 = vpop.permute.xlu0 %322
      %324 = vset.pattern.permute.xlu0 1
      %325 = vperm.xlu0 %324, %v300
      %v326 = vpop.permute.xlu0 %325
      %327 = vset.pattern.permute.xlu0 1
      %328 = vperm.xlu0 %327, %v301
      %v329 = vpop.permute.xlu0 %328
      %330 = vset.pattern.permute.xlu0 1
      %331 = vperm.xlu0 %330, %v302
      %v332 = vpop.permute.xlu0 %331
      %333 = vset.pattern.permute.xlu0 1
      %334 = vperm.xlu0 %333, %v303
      %v335 = vpop.permute.xlu0 %334
      %336 = vset.pattern.permute.xlu0 1
      %337 = vperm.xlu0 %336, %v304
      %v338 = vpop.permute.xlu0 %337
      %339 = vset.pattern.permute.xlu0 1
      %340 = vperm.xlu0 %339, %v305
      %v341 = vpop.permute.xlu0 %340
      %342 = vset.pattern.permute.xlu0 1
      %343 = vperm.xlu0 %342, %v306
      %v344 = vpop.permute.xlu0 %343
      %345 = vset.pattern.permute.xlu0 1
      %346 = vperm.xlu0 %345, %v307
      %v347 = vpop.permute.xlu0 %346
      %348 = vset.pattern.permute.xlu0 1
      %349 = vperm.xlu0 %348, %v308
      %v350 = vpop.permute.xlu0 %349
      %351 = vset.pattern.permute.xlu0 1
      %352 = vperm.xlu0 %351, %v309
      %v353 = vpop.permute.xlu0 %352
      %354 = vset.pattern.permute.xlu0 1
      %355 = vperm.xlu0 %354, %v310
      %v356 = vpop.permute.xlu0 %355
      %357 = vset.pattern.permute.xlu0 1
      %358 = vperm.xlu0 %357, %v311
      %v359 = vpop.permute.xlu0 %358
      %vm360 = vcmp.eq.s32.totalorder %v293, %v314
      %vm361 = vcmp.eq.s32.totalorder %v294, %v314
      %vm362 = vcmp.eq.s32.totalorder %v295, %v314
      %vm363 = vcmp.eq.s32.totalorder %v293, %v317
      %vm364 = vcmp.eq.s32.totalorder %v294, %v317
      %vm365 = vcmp.eq.s32.totalorder %v295, %v317
      %vm366 = vcmp.eq.s32.totalorder %v293, %v320
      %vm367 = vcmp.eq.s32.totalorder %v294, %v320
      %vm368 = vcmp.eq.s32.totalorder %v295, %v320
      %vm369 = vcmp.eq.s32.totalorder %v293, %v323
      %vm370 = vcmp.eq.s32.totalorder %v294, %v323
      %vm371 = vcmp.eq.s32.totalorder %v295, %v323
      %vm372 = vcmp.eq.s32.totalorder %v293, %v326
      %vm373 = vcmp.eq.s32.totalorder %v294, %v326
      %vm374 = vcmp.eq.s32.totalorder %v295, %v326
      %vm375 = vcmp.eq.s32.totalorder %v293, %v329
      %vm376 = vcmp.eq.s32.totalorder %v294, %v329
      %vm377 = vcmp.eq.s32.totalorder %v295, %v329
      %vm378 = vcmp.eq.s32.totalorder %v293, %v332
      %vm379 = vcmp.eq.s32.totalorder %v294, %v332
      %vm380 = vcmp.eq.s32.totalorder %v295, %v332
      %vm381 = vcmp.eq.s32.totalorder %v293, %v335
      %vm382 = vcmp.eq.s32.totalorder %v294, %v335
      %vm383 = vcmp.eq.s32.totalorder %v295, %v335
      %vm384 = vcmp.eq.s32.totalorder %v293, %v338
      %vm385 = vcmp.eq.s32.totalorder %v294, %v338
      %vm386 = vcmp.eq.s32.totalorder %v295, %v338
      %vm387 = vcmp.eq.s32.totalorder %v293, %v341
      %vm388 = vcmp.eq.s32.totalorder %v294, %v341
      %vm389 = vcmp.eq.s32.totalorder %v295, %v341
      %vm390 = vcmp.eq.s32.totalorder %v293, %v344
      %vm391 = vcmp.eq.s32.totalorder %v294, %v344
      %vm392 = vcmp.eq.s32.totalorder %v295, %v344
      %vm393 = vcmp.eq.s32.totalorder %v293, %v347
      %vm394 = vcmp.eq.s32.totalorder %v294, %v347
      %vm395 = vcmp.eq.s32.totalorder %v295, %v347
      %vm396 = vcmp.eq.s32.totalorder %v293, %v350
      %vm397 = vcmp.eq.s32.totalorder %v294, %v350
      %vm398 = vcmp.eq.s32.totalorder %v295, %v350
      %vm399 = vcmp.eq.s32.totalorder %v293, %v353
      %vm400 = vcmp.eq.s32.totalorder %v294, %v353
      %vm401 = vcmp.eq.s32.totalorder %v295, %v353
      %vm402 = vcmp.eq.s32.totalorder %v293, %v356
      %vm403 = vcmp.eq.s32.totalorder %v294, %v356
      %vm404 = vcmp.eq.s32.totalorder %v295, %v356
      %vm405 = vcmp.eq.s32.totalorder %v293, %v359
      %vm406 = vcmp.eq.s32.totalorder %v294, %v359
      %vm407 = vcmp.eq.s32.totalorder %v295, %v359
      %v408 = vadd.s32 %v276, 291
      %v409 = vadd.s32 %v277, 291
      %v410 = vadd.s32 %v278, 291
      %v411 = vadd.s32 %v279, 291
      %v412 = vadd.s32 %v280, 291
      %v413 = vadd.s32 %v281, 291
      %v414 = vadd.s32 %v282, 291
      %v415 = vadd.s32 %v283, 291
      %v416 = vadd.s32 %v284, 291
      %v417 = vadd.s32 %v285, 291
      %v418 = vadd.s32 %v286, 291
      %v419 = vadd.s32 %v287, 291
      %v420 = vadd.s32 %v288, 291
      %v421 = vadd.s32 %v289, 291
      %v422 = vadd.s32 %v290, 291
      %v423 = vadd.s32 %v291, 291
      %424 = vset.pattern.permute.xlu0 2
      %425 = vperm.xlu0 %424, %v408
      %v426 = vpop.permute.xlu0 %425
      %427 = vset.pattern.permute.xlu0 2
      %428 = vperm.xlu0 %427, %v409
      %v429 = vpop.permute.xlu0 %428
      %430 = vset.pattern.permute.xlu0 2
      %431 = vperm.xlu0 %430, %v410
      %v432 = vpop.permute.xlu0 %431
      %433 = vset.pattern.permute.xlu0 2
      %434 = vperm.xlu0 %433, %v411
      %v435 = vpop.permute.xlu0 %434
      %436 = vset.pattern.permute.xlu0 2
      %437 = vperm.xlu0 %436, %v412
      %v438 = vpop.permute.xlu0 %437
      %439 = vset.pattern.permute.xlu0 2
      %440 = vperm.xlu0 %439, %v413
      %v441 = vpop.permute.xlu0 %440
      %442 = vset.pattern.permute.xlu0 2
      %443 = vperm.xlu0 %442, %v414
      %v444 = vpop.permute.xlu0 %443
      %445 = vset.pattern.permute.xlu0 2
      %446 = vperm.xlu0 %445, %v415
      %v447 = vpop.permute.xlu0 %446
      %448 = vset.pattern.permute.xlu0 2
      %449 = vperm.xlu0 %448, %v416
      %v450 = vpop.permute.xlu0 %449
      %451 = vset.pattern.permute.xlu0 2
      %452 = vperm.xlu0 %451, %v417
      %v453 = vpop.permute.xlu0 %452
      %454 = vset.pattern.permute.xlu0 2
      %455 = vperm.xlu0 %454, %v418
      %v456 = vpop.permute.xlu0 %455
      %457 = vset.pattern.permute.xlu0 2
      %458 = vperm.xlu0 %457, %v419
      %v459 = vpop.permute.xlu0 %458
      %460 = vset.pattern.permute.xlu0 2
      %461 = vperm.xlu0 %460, %v420
      %v462 = vpop.permute.xlu0 %461
      %463 = vset.pattern.permute.xlu0 2
      %464 = vperm.xlu0 %463, %v421
      %v465 = vpop.permute.xlu0 %464
      %466 = vset.pattern.permute.xlu0 2
      %467 = vperm.xlu0 %466, %v422
      %v468 = vpop.permute.xlu0 %467
      %469 = vset.pattern.permute.xlu0 2
      %470 = vperm.xlu0 %469, %v423
      %v471 = vpop.permute.xlu0 %470
      %vm472 = vcmp.eq.s32.totalorder %v293, %v426
      %vm473 = vcmp.eq.s32.totalorder %v294, %v426
      %vm474 = vcmp.eq.s32.totalorder %v295, %v426
      %vm475 = vcmp.eq.s32.totalorder %v293, %v429
      %vm476 = vcmp.eq.s32.totalorder %v294, %v429
      %vm477 = vcmp.eq.s32.totalorder %v295, %v429
      %vm478 = vcmp.eq.s32.totalorder %v293, %v432
      %vm479 = vcmp.eq.s32.totalorder %v294, %v432
      %vm480 = vcmp.eq.s32.totalorder %v295, %v432
      %vm481 = vcmp.eq.s32.totalorder %v293, %v435
      %vm482 = vcmp.eq.s32.totalorder %v294, %v435
      %vm483 = vcmp.eq.s32.totalorder %v295, %v435
      %vm484 = vcmp.eq.s32.totalorder %v293, %v438
      %vm485 = vcmp.eq.s32.totalorder %v294, %v438
      %vm486 = vcmp.eq.s32.totalorder %v295, %v438
      %vm487 = vcmp.eq.s32.totalorder %v293, %v441
      %vm488 = vcmp.eq.s32.totalorder %v294, %v441
      %vm489 = vcmp.eq.s32.totalorder %v295, %v441
      %vm490 = vcmp.eq.s32.totalorder %v293, %v444
      %vm491 = vcmp.eq.s32.totalorder %v294, %v444
      %vm492 = vcmp.eq.s32.totalorder %v295, %v444
      %vm493 = vcmp.eq.s32.totalorder %v293, %v447
      %vm494 = vcmp.eq.s32.totalorder %v294, %v447
      %vm495 = vcmp.eq.s32.totalorder %v295, %v447
      %vm496 = vcmp.eq.s32.totalorder %v293, %v450
      %vm497 = vcmp.eq.s32.totalorder %v294, %v450
      %vm498 = vcmp.eq.s32.totalorder %v295, %v450
      %vm499 = vcmp.eq.s32.totalorder %v293, %v453
      %vm500 = vcmp.eq.s32.totalorder %v294, %v453
      %vm501 = vcmp.eq.s32.totalorder %v295, %v453
      %vm502 = vcmp.eq.s32.totalorder %v293, %v456
      %vm503 = vcmp.eq.s32.totalorder %v294, %v456
      %vm504 = vcmp.eq.s32.totalorder %v295, %v456
      %vm505 = vcmp.eq.s32.totalorder %v293, %v459
      %vm506 = vcmp.eq.s32.totalorder %v294, %v459
      %vm507 = vcmp.eq.s32.totalorder %v295, %v459
      %vm508 = vcmp.eq.s32.totalorder %v293, %v462
      %vm509 = vcmp.eq.s32.totalorder %v294, %v462
      %vm510 = vcmp.eq.s32.totalorder %v295, %v462
      %vm511 = vcmp.eq.s32.totalorder %v293, %v465
      %vm512 = vcmp.eq.s32.totalorder %v294, %v465
      %vm513 = vcmp.eq.s32.totalorder %v295, %v465
      %vm514 = vcmp.eq.s32.totalorder %v293, %v468
      %vm515 = vcmp.eq.s32.totalorder %v294, %v468
      %vm516 = vcmp.eq.s32.totalorder %v295, %v468
      %vm517 = vcmp.eq.s32.totalorder %v293, %v471
      %vm518 = vcmp.eq.s32.totalorder %v294, %v471
      %vm519 = vcmp.eq.s32.totalorder %v295, %v471
      %vm520 = vmor %vm360, %vm472
      %vm521 = vmor %vm361, %vm473
      %vm522 = vmor %vm362, %vm474
      %vm523 = vmor %vm363, %vm475
      %vm524 = vmor %vm364, %vm476
      %vm525 = vmor %vm365, %vm477
      %vm526 = vmor %vm366, %vm478
      %vm527 = vmor %vm367, %vm479
      %vm528 = vmor %vm368, %vm480
      %vm529 = vmor %vm369, %vm481
      %vm530 = vmor %vm370, %vm482
      %vm531 = vmor %vm371, %vm483
      %vm532 = vmor %vm372, %vm484
      %vm533 = vmor %vm373, %vm485
      %vm534 = vmor %vm374, %vm486
      %vm535 = vmor %vm375, %vm487
      %vm536 = vmor %vm376, %vm488
      %vm537 = vmor %vm377, %vm489
      %vm538 = vmor %vm378, %vm490
      %vm539 = vmor %vm379, %vm491
      %vm540 = vmor %vm380, %vm492
      %vm541 = vmor %vm381, %vm493
      %vm542 = vmor %vm382, %vm494
      %vm543 = vmor %vm383, %vm495
      %vm544 = vmor %vm384, %vm496
      %vm545 = vmor %vm385, %vm497
      %vm546 = vmor %vm386, %vm498
      %vm547 = vmor %vm387, %vm499
      %vm548 = vmor %vm388, %vm500
      %vm549 = vmor %vm389, %vm501
      %vm550 = vmor %vm390, %vm502
      %vm551 = vmor %vm391, %vm503
      %vm552 = vmor %vm392, %vm504
      %vm553 = vmor %vm393, %vm505
      %vm554 = vmor %vm394, %vm506
      %vm555 = vmor %vm395, %vm507
      %vm556 = vmor %vm396, %vm508
      %vm557 = vmor %vm397, %vm509
      %vm558 = vmor %vm398, %vm510
      %vm559 = vmor %vm399, %vm511
      %vm560 = vmor %vm400, %vm512
      %vm561 = vmor %vm401, %vm513
      %vm562 = vmor %vm402, %vm514
      %vm563 = vmor %vm403, %vm515
      %vm564 = vmor %vm404, %vm516
      %vm565 = vmor %vm405, %vm517
      %vm566 = vmor %vm406, %vm518
      %vm567 = vmor %vm407, %vm519
      %vm568 = vcmp.eq.s32.totalorder %v293, 0
      %vm569 = vcmp.eq.s32.totalorder %v294, 0
      %vm570 = vcmp.eq.s32.totalorder %v295, 0
      %vm571 = vcmp.eq.s32.totalorder %v293, 1
      %vm572 = vcmp.eq.s32.totalorder %v294, 1
      %vm573 = vcmp.eq.s32.totalorder %v295, 1
      %575 = vset.pattern.permute.xlu0 1
      %576 = vperm.xlu0 %575, %v228
      %v577 = vpop.permute.xlu0 %576
      %580 = vset.pattern.permute.xlu0 1
      %581 = vperm.xlu0 %580, %v229
      %v582 = vpop.permute.xlu0 %581
      %585 = vset.pattern.permute.xlu0 1
      %586 = vperm.xlu0 %585, %v230
      %v587 = vpop.permute.xlu0 %586
      %590 = vset.pattern.permute.xlu0 1
      %591 = vperm.xlu0 %590, %v231
      %v592 = vpop.permute.xlu0 %591
      %595 = vset.pattern.permute.xlu0 1
      %596 = vperm.xlu0 %595, %v232
      %v597 = vpop.permute.xlu0 %596
      %600 = vset.pattern.permute.xlu0 1
      %601 = vperm.xlu0 %600, %v233
      %v602 = vpop.permute.xlu0 %601
      %605 = vset.pattern.permute.xlu0 1
      %606 = vperm.xlu0 %605, %v234
      %v607 = vpop.permute.xlu0 %606
      %610 = vset.pattern.permute.xlu0 1
      %611 = vperm.xlu0 %610, %v235
      %v612 = vpop.permute.xlu0 %611
      %615 = vset.pattern.permute.xlu0 1
      %616 = vperm.xlu0 %615, %v236
      %v617 = vpop.permute.xlu0 %616
      %620 = vset.pattern.permute.xlu0 1
      %621 = vperm.xlu0 %620, %v237
      %v622 = vpop.permute.xlu0 %621
      %625 = vset.pattern.permute.xlu0 1
      %626 = vperm.xlu0 %625, %v238
      %v627 = vpop.permute.xlu0 %626
      %630 = vset.pattern.permute.xlu0 1
      %631 = vperm.xlu0 %630, %v239
      %v632 = vpop.permute.xlu0 %631
      %635 = vset.pattern.permute.xlu0 1
      %636 = vperm.xlu0 %635, %v240
      %v637 = vpop.permute.xlu0 %636
      %640 = vset.pattern.permute.xlu0 1
      %641 = vperm.xlu0 %640, %v241
      %v642 = vpop.permute.xlu0 %641
      %645 = vset.pattern.permute.xlu0 1
      %646 = vperm.xlu0 %645, %v242
      %v647 = vpop.permute.xlu0 %646
      %650 = vset.pattern.permute.xlu0 1
      %651 = vperm.xlu0 %650, %v243
      %v652 = vpop.permute.xlu0 %651
      %654 = vset.pattern.permute.xlu0 2
      %655 = vperm.xlu0 %654, %v228
      %v656 = vpop.permute.xlu0 %655
      %658 = vset.pattern.permute.xlu0 2
      %659 = vperm.xlu0 %658, %v229
      %v660 = vpop.permute.xlu0 %659
      %662 = vset.pattern.permute.xlu0 2
      %663 = vperm.xlu0 %662, %v230
      %v664 = vpop.permute.xlu0 %663
      %666 = vset.pattern.permute.xlu0 2
      %667 = vperm.xlu0 %666, %v231
      %v668 = vpop.permute.xlu0 %667
      %670 = vset.pattern.permute.xlu0 2
      %671 = vperm.xlu0 %670, %v232
      %v672 = vpop.permute.xlu0 %671
      %674 = vset.pattern.permute.xlu0 2
      %675 = vperm.xlu0 %674, %v233
      %v676 = vpop.permute.xlu0 %675
      %678 = vset.pattern.permute.xlu0 2
      %679 = vperm.xlu0 %678, %v234
      %v680 = vpop.permute.xlu0 %679
      %682 = vset.pattern.permute.xlu0 2
      %683 = vperm.xlu0 %682, %v235
      %v684 = vpop.permute.xlu0 %683
      %686 = vset.pattern.permute.xlu0 2
      %687 = vperm.xlu0 %686, %v236
      %v688 = vpop.permute.xlu0 %687
      %690 = vset.pattern.permute.xlu0 2
      %691 = vperm.xlu0 %690, %v237
      %v692 = vpop.permute.xlu0 %691
      %694 = vset.pattern.permute.xlu0 2
      %695 = vperm.xlu0 %694, %v238
      %v696 = vpop.permute.xlu0 %695
      %698 = vset.pattern.permute.xlu0 2
      %699 = vperm.xlu0 %698, %v239
      %v700 = vpop.permute.xlu0 %699
      %702 = vset.pattern.permute.xlu0 2
      %703 = vperm.xlu0 %702, %v240
      %v704 = vpop.permute.xlu0 %703
      %706 = vset.pattern.permute.xlu0 2
      %707 = vperm.xlu0 %706, %v241
      %v708 = vpop.permute.xlu0 %707
      %710 = vset.pattern.permute.xlu0 2
      %711 = vperm.xlu0 %710, %v242
      %v712 = vpop.permute.xlu0 %711
      %714 = vset.pattern.permute.xlu0 2
      %715 = vperm.xlu0 %714, %v243
      %v716 = vpop.permute.xlu0 %715
      %v718 = vsel %vm571, %v577, %v656
      %v719 = vsel %vm572, %v577, %v656
      %v720 = vsel %vm573, %v577, %v656
      %v721 = vsel %vm571, %v582, %v660
      %v722 = vsel %vm572, %v582, %v660
      %v723 = vsel %vm573, %v582, %v660
      %v724 = vsel %vm571, %v587, %v664
      %v725 = vsel %vm572, %v587, %v664
      %v726 = vsel %vm573, %v587, %v664
      %v727 = vsel %vm571, %v592, %v668
      %v728 = vsel %vm572, %v592, %v668
      %v729 = vsel %vm573, %v592, %v668
      %v730 = vsel %vm571, %v597, %v672
      %v731 = vsel %vm572, %v597, %v672
      %v732 = vsel %vm573, %v597, %v672
      %v733 = vsel %vm571, %v602, %v676
      %v734 = vsel %vm572, %v602, %v676
      %v735 = vsel %vm573, %v602, %v676
      %v736 = vsel %vm571, %v607, %v680
      %v737 = vsel %vm572, %v607, %v680
      %v738 = vsel %vm573, %v607, %v680
      %v739 = vsel %vm571, %v612, %v684
      %v740 = vsel %vm572, %v612, %v684
      %v741 = vsel %vm573, %v612, %v684
      %v742 = vsel %vm571, %v617, %v688
      %v743 = vsel %vm572, %v617, %v688
      %v744 = vsel %vm573, %v617, %v688
      %v745 = vsel %vm571, %v622, %v692
      %v746 = vsel %vm572, %v622, %v692
      %v747 = vsel %vm573, %v622, %v692
      %v748 = vsel %vm571, %v627, %v696
      %v749 = vsel %vm572, %v627, %v696
      %v750 = vsel %vm573, %v627, %v696
      %v751 = vsel %vm571, %v632, %v700
      %v752 = vsel %vm572, %v632, %v700
      %v753 = vsel %vm573, %v632, %v700
      %v754 = vsel %vm571, %v637, %v704
      %v755 = vsel %vm572, %v637, %v704
      %v756 = vsel %vm573, %v637, %v704
      %v757 = vsel %vm571, %v642, %v708
      %v758 = vsel %vm572, %v642, %v708
      %v759 = vsel %vm573, %v642, %v708
      %v760 = vsel %vm571, %v647, %v712
      %v761 = vsel %vm572, %v647, %v712
      %v762 = vsel %vm573, %v647, %v712
      %v763 = vsel %vm571, %v652, %v716
      %v764 = vsel %vm572, %v652, %v716
      %v765 = vsel %vm573, %v652, %v716
      %766 = vset.pattern.permute.xlu0 0
      %767 = vperm.xlu0 %766, %v228
      %v768 = vpop.permute.xlu0 %767
      %770 = vset.pattern.permute.xlu0 0
      %771 = vperm.xlu0 %770, %v229
      %v772 = vpop.permute.xlu0 %771
      %774 = vset.pattern.permute.xlu0 0
      %775 = vperm.xlu0 %774, %v230
      %v776 = vpop.permute.xlu0 %775
      %778 = vset.pattern.permute.xlu0 0
      %779 = vperm.xlu0 %778, %v231
      %v780 = vpop.permute.xlu0 %779
      %782 = vset.pattern.permute.xlu0 0
      %783 = vperm.xlu0 %782, %v232
      %v784 = vpop.permute.xlu0 %783
      %786 = vset.pattern.permute.xlu0 0
      %787 = vperm.xlu0 %786, %v233
      %v788 = vpop.permute.xlu0 %787
      %790 = vset.pattern.permute.xlu0 0
      %791 = vperm.xlu0 %790, %v234
      %v792 = vpop.permute.xlu0 %791
      %794 = vset.pattern.permute.xlu0 0
      %795 = vperm.xlu0 %794, %v235
      %v796 = vpop.permute.xlu0 %795
      %798 = vset.pattern.permute.xlu0 0
      %799 = vperm.xlu0 %798, %v236
      %v800 = vpop.permute.xlu0 %799
      %802 = vset.pattern.permute.xlu0 0
      %803 = vperm.xlu0 %802, %v237
      %v804 = vpop.permute.xlu0 %803
      %806 = vset.pattern.permute.xlu0 0
      %807 = vperm.xlu0 %806, %v238
      %v808 = vpop.permute.xlu0 %807
      %810 = vset.pattern.permute.xlu0 0
      %811 = vperm.xlu0 %810, %v239
      %v812 = vpop.permute.xlu0 %811
      %814 = vset.pattern.permute.xlu0 0
      %815 = vperm.xlu0 %814, %v240
      %v816 = vpop.permute.xlu0 %815
      %818 = vset.pattern.permute.xlu0 0
      %819 = vperm.xlu0 %818, %v241
      %v820 = vpop.permute.xlu0 %819
      %822 = vset.pattern.permute.xlu0 0
      %823 = vperm.xlu0 %822, %v242
      %v824 = vpop.permute.xlu0 %823
      %826 = vset.pattern.permute.xlu0 0
      %827 = vperm.xlu0 %826, %v243
      %v828 = vpop.permute.xlu0 %827
      %v830 = vsel %vm568, %v768, %v718
      %v831 = vsel %vm569, %v768, %v719
      %v832 = vsel %vm570, %v768, %v720
      %v833 = vsel %vm568, %v772, %v721
      %v834 = vsel %vm569, %v772, %v722
      %v835 = vsel %vm570, %v772, %v723
      %v836 = vsel %vm568, %v776, %v724
      %v837 = vsel %vm569, %v776, %v725
      %v838 = vsel %vm570, %v776, %v726
      %v839 = vsel %vm568, %v780, %v727
      %v840 = vsel %vm569, %v780, %v728
      %v841 = vsel %vm570, %v780, %v729
      %v842 = vsel %vm568, %v784, %v730
      %v843 = vsel %vm569, %v784, %v731
      %v844 = vsel %vm570, %v784, %v732
      %v845 = vsel %vm568, %v788, %v733
      %v846 = vsel %vm569, %v788, %v734
      %v847 = vsel %vm570, %v788, %v735
      %v848 = vsel %vm568, %v792, %v736
      %v849 = vsel %vm569, %v792, %v737
      %v850 = vsel %vm570, %v792, %v738
      %v851 = vsel %vm568, %v796, %v739
      %v852 = vsel %vm569, %v796, %v740
      %v853 = vsel %vm570, %v796, %v741
      %v854 = vsel %vm568, %v800, %v742
      %v855 = vsel %vm569, %v800, %v743
      %v856 = vsel %vm570, %v800, %v744
      %v857 = vsel %vm568, %v804, %v745
      %v858 = vsel %vm569, %v804, %v746
      %v859 = vsel %vm570, %v804, %v747
      %v860 = vsel %vm568, %v808, %v748
      %v861 = vsel %vm569, %v808, %v749
      %v862 = vsel %vm570, %v808, %v750
      %v863 = vsel %vm568, %v812, %v751
      %v864 = vsel %vm569, %v812, %v752
      %v865 = vsel %vm570, %v812, %v753
      %v866 = vsel %vm568, %v816, %v754
      %v867 = vsel %vm569, %v816, %v755
      %v868 = vsel %vm570, %v816, %v756
      %v869 = vsel %vm568, %v820, %v757
      %v870 = vsel %vm569, %v820, %v758
      %v871 = vsel %vm570, %v820, %v759
      %v872 = vsel %vm568, %v824, %v760
      %v873 = vsel %vm569, %v824, %v761
      %v874 = vsel %vm570, %v824, %v762
      %v875 = vsel %vm568, %v828, %v763
      %v876 = vsel %vm569, %v828, %v764
      %v877 = vsel %vm570, %v828, %v765
      %vm878 = vcmp.lt.s32.totalorder %v293, 3
      %vm879 = vcmp.lt.s32.totalorder %v294, 3
      %vm880 = vcmp.lt.s32.totalorder %v295, 3
      %v881 = vsel %vm520, 1, 0
      %v882 = vsel %vm521, 1, 0
      %v883 = vsel %vm522, 1, 0
      %v884 = vsel %vm523, 1, 0
      %v885 = vsel %vm524, 1, 0
      %v886 = vsel %vm525, 1, 0
      %v887 = vsel %vm526, 1, 0
      %v888 = vsel %vm527, 1, 0
      %v889 = vsel %vm528, 1, 0
      %v890 = vsel %vm529, 1, 0
      %v891 = vsel %vm530, 1, 0
      %v892 = vsel %vm531, 1, 0
      %v893 = vsel %vm532, 1, 0
      %v894 = vsel %vm533, 1, 0
      %v895 = vsel %vm534, 1, 0
      %v896 = vsel %vm535, 1, 0
      %v897 = vsel %vm536, 1, 0
      %v898 = vsel %vm537, 1, 0
      %v899 = vsel %vm538, 1, 0
      %v900 = vsel %vm539, 1, 0
      %v901 = vsel %vm540, 1, 0
      %v902 = vsel %vm541, 1, 0
      %v903 = vsel %vm542, 1, 0
      %v904 = vsel %vm543, 1, 0
      %v905 = vsel %vm544, 1, 0
      %v906 = vsel %vm545, 1, 0
      %v907 = vsel %vm546, 1, 0
      %v908 = vsel %vm547, 1, 0
      %v909 = vsel %vm548, 1, 0
      %v910 = vsel %vm549, 1, 0
      %v911 = vsel %vm550, 1, 0
      %v912 = vsel %vm551, 1, 0
      %v913 = vsel %vm552, 1, 0
      %v914 = vsel %vm553, 1, 0
      %v915 = vsel %vm554, 1, 0
      %v916 = vsel %vm555, 1, 0
      %v917 = vsel %vm556, 1, 0
      %v918 = vsel %vm557, 1, 0
      %v919 = vsel %vm558, 1, 0
      %v920 = vsel %vm559, 1, 0
      %v921 = vsel %vm560, 1, 0
      %v922 = vsel %vm561, 1, 0
      %v923 = vsel %vm562, 1, 0
      %v924 = vsel %vm563, 1, 0
      %v925 = vsel %vm564, 1, 0
      %v926 = vsel %vm565, 1, 0
      %v927 = vsel %vm566, 1, 0
      %v928 = vsel %vm567, 1, 0
      %v929 = vcvt.s32.f32 %v881
      %v930 = vcvt.s32.f32 %v882
      %v931 = vcvt.s32.f32 %v883
      %v932 = vcvt.s32.f32 %v884
      %v933 = vcvt.s32.f32 %v885
      %v934 = vcvt.s32.f32 %v886
      %v935 = vcvt.s32.f32 %v887
      %v936 = vcvt.s32.f32 %v888
      %v937 = vcvt.s32.f32 %v889
      %v938 = vcvt.s32.f32 %v890
      %v939 = vcvt.s32.f32 %v891
      %v940 = vcvt.s32.f32 %v892
      %v941 = vcvt.s32.f32 %v893
      %v942 = vcvt.s32.f32 %v894
      %v943 = vcvt.s32.f32 %v895
      %v944 = vcvt.s32.f32 %v896
      %v945 = vcvt.s32.f32 %v897
      %v946 = vcvt.s32.f32 %v898
      %v947 = vcvt.s32.f32 %v899
      %v948 = vcvt.s32.f32 %v900
      %v949 = vcvt.s32.f32 %v901
      %v950 = vcvt.s32.f32 %v902
      %v951 = vcvt.s32.f32 %v903
      %v952 = vcvt.s32.f32 %v904
      %v953 = vcvt.s32.f32 %v905
      %v954 = vcvt.s32.f32 %v906
      %v955 = vcvt.s32.f32 %v907
      %v956 = vcvt.s32.f32 %v908
      %v957 = vcvt.s32.f32 %v909
      %v958 = vcvt.s32.f32 %v910
      %v959 = vcvt.s32.f32 %v911
      %v960 = vcvt.s32.f32 %v912
      %v961 = vcvt.s32.f32 %v913
      %v962 = vcvt.s32.f32 %v914
      %v963 = vcvt.s32.f32 %v915
      %v964 = vcvt.s32.f32 %v916
      %v965 = vcvt.s32.f32 %v917
      %v966 = vcvt.s32.f32 %v918
      %v967 = vcvt.s32.f32 %v919
      %v968 = vcvt.s32.f32 %v920
      %v969 = vcvt.s32.f32 %v921
      %v970 = vcvt.s32.f32 %v922
      %v971 = vcvt.s32.f32 %v923
      %v972 = vcvt.s32.f32 %v924
      %v973 = vcvt.s32.f32 %v925
      %v974 = vcvt.s32.f32 %v926
      %v975 = vcvt.s32.f32 %v927
      %v976 = vcvt.s32.f32 %v928
      %v977 = vsel %vm878, %v830, %v929
      %v978 = vsel %vm879, %v831, %v930
      %v979 = vsel %vm880, %v832, %v931
      %v980 = vsel %vm878, %v833, %v932
      %v981 = vsel %vm879, %v834, %v933
      %v982 = vsel %vm880, %v835, %v934
      %v983 = vsel %vm878, %v836, %v935
      %v984 = vsel %vm879, %v837, %v936
      %v985 = vsel %vm880, %v838, %v937
      %v986 = vsel %vm878, %v839, %v938
      %v987 = vsel %vm879, %v840, %v939
      %v988 = vsel %vm880, %v841, %v940
      %v989 = vsel %vm878, %v842, %v941
      %v990 = vsel %vm879, %v843, %v942
      %v991 = vsel %vm880, %v844, %v943
      %v992 = vsel %vm878, %v845, %v944
      %v993 = vsel %vm879, %v846, %v945
      %v994 = vsel %vm880, %v847, %v946
      %v995 = vsel %vm878, %v848, %v947
      %v996 = vsel %vm879, %v849, %v948
      %v997 = vsel %vm880, %v850, %v949
      %v998 = vsel %vm878, %v851, %v950
      %v999 = vsel %vm879, %v852, %v951
      %v1000 = vsel %vm880, %v853, %v952
      %v1001 = vsel %vm878, %v854, %v953
      %v1002 = vsel %vm879, %v855, %v954
      %v1003 = vsel %vm880, %v856, %v955
      %v1004 = vsel %vm878, %v857, %v956
      %v1005 = vsel %vm879, %v858, %v957
      %v1006 = vsel %vm880, %v859, %v958
      %v1007 = vsel %vm878, %v860, %v959
      %v1008 = vsel %vm879, %v861, %v960
      %v1009 = vsel %vm880, %v862, %v961
      %v1010 = vsel %vm878, %v863, %v962
      %v1011 = vsel %vm879, %v864, %v963
      %v1012 = vsel %vm880, %v865, %v964
      %v1013 = vsel %vm878, %v866, %v965
      %v1014 = vsel %vm879, %v867, %v966
      %v1015 = vsel %vm880, %v868, %v967
      %v1016 = vsel %vm878, %v869, %v968
      %v1017 = vsel %vm879, %v870, %v969
      %v1018 = vsel %vm880, %v871, %v970
      %v1019 = vsel %vm878, %v872, %v971
      %v1020 = vsel %vm879, %v873, %v972
      %v1021 = vsel %vm880, %v874, %v973
      %v1022 = vsel %vm878, %v875, %v974
      %v1023 = vsel %vm879, %v876, %v975
      %v1024 = vsel %vm880, %v877, %v976
      %v1025 = vpack.c.bf16 %v980, %v977
      %v1026 = vpack.c.bf16 %v981, %v978
      %v1027 = vpack.c.bf16 %v982, %v979
      %v1028 = vpack.c.bf16 %v986, %v983
      %v1029 = vpack.c.bf16 %v987, %v984
      %v1030 = vpack.c.bf16 %v988, %v985
      %v1031 = vpack.c.bf16 %v992, %v989
      %v1032 = vpack.c.bf16 %v993, %v990
      %v1033 = vpack.c.bf16 %v994, %v991
      %v1034 = vpack.c.bf16 %v998, %v995
      %v1035 = vpack.c.bf16 %v999, %v996
      %v1036 = vpack.c.bf16 %v1000, %v997
      %v1037 = vpack.c.bf16 %v1004, %v1001
      %v1038 = vpack.c.bf16 %v1005, %v1002
      %v1039 = vpack.c.bf16 %v1006, %v1003
      %v1040 = vpack.c.bf16 %v1010, %v1007
      %v1041 = vpack.c.bf16 %v1011, %v1008
      %v1042 = vpack.c.bf16 %v1012, %v1009
      %v1043 = vpack.c.bf16 %v1016, %v1013
      %v1044 = vpack.c.bf16 %v1017, %v1014
      %v1045 = vpack.c.bf16 %v1018, %v1015
      %v1046 = vpack.c.bf16 %v1022, %v1019
      %v1047 = vpack.c.bf16 %v1023, %v1020
      %v1048 = vpack.c.bf16 %v1024, %v1021
      %v1049 = vld [vmem:[%s1] sm:$0xf]
      %v1050 = vld [vmem:[%s1 + $0x4] sm:$0xf]
      %v1051 = vld [vmem:[%s1 + $0x8] sm:$0xf]
      %v1052 = vld [vmem:[%s1 + $0xc] sm:$0xf]
      %v1053 = vld [vmem:[%s1 + $0x10] sm:$0xf]
      %v1054 = vld [vmem:[%s1 + $0x14] sm:$0xf]
      %v1055 = vld [vmem:[%s1 + $0x18] sm:$0xf]
      %v1056 = vld [vmem:[%s1 + $0x1c] sm:$0xf]
      %v1057 = vld [vmem:[%s1 + $0x20] sm:$0xf]
      %v1058 = vld [vmem:[%s1 + $0x24] sm:$0xf]
      %v1059 = vld [vmem:[%s1 + $0x28] sm:$0xf]
      %v1060 = vld [vmem:[%s1 + $0x2c] sm:$0xf]
      %v1061 = vld [vmem:[%s1 + $0x30] sm:$0xf]
      %v1062 = vld [vmem:[%s1 + $0x34] sm:$0xf]
      %v1063 = vld [vmem:[%s1 + $0x38] sm:$0xf]
      %v1064 = vld [vmem:[%s1 + $0x3c] sm:$0xf]
      %v1065 = vld [vmem:[%s1 + $0x40] sm:$0xf]
      %v1066 = vld [vmem:[%s1 + $0x44] sm:$0xf]
      %v1067 = vld [vmem:[%s1 + $0x48] sm:$0xf]
      %v1068 = vld [vmem:[%s1 + $0x4c] sm:$0xf]
      %v1069 = vld [vmem:[%s1 + $0x50] sm:$0xf]
      %v1070 = vld [vmem:[%s1 + $0x54] sm:$0xf]
      %v1071 = vld [vmem:[%s1 + $0x58] sm:$0xf]
      %v1072 = vld [vmem:[%s1 + $0x5c] sm:$0xf]
      %v1073 = vld [vmem:[%s1 + $0x60] sm:$0xf]
      %v1074 = vld [vmem:[%s1 + $0x64] sm:$0xf]
      %v1075 = vld [vmem:[%s1 + $0x68] sm:$0xf]
      %v1076 = vld [vmem:[%s1 + $0x6c] sm:$0xf]
      %v1077 = vld [vmem:[%s1 + $0x70] sm:$0xf]
      %v1078 = vld [vmem:[%s1 + $0x74] sm:$0xf]
      %v1079 = vld [vmem:[%s1 + $0x78] sm:$0xf]
      %v1080 = vld [vmem:[%s1 + $0x7c] sm:$0xf]
      %v1081 = vld [vmem:[%s1 + $0x80] sm:$0xf]
      %v1082 = vld [vmem:[%s1 + $0x84] sm:$0xf]
      %v1083 = vld [vmem:[%s1 + $0x88] sm:$0xf]
      %v1084 = vld [vmem:[%s1 + $0x8c] sm:$0xf]
      %v1085 = vld [vmem:[%s1 + $0x90] sm:$0xf]
      %v1086 = vld [vmem:[%s1 + $0x94] sm:$0xf]
      %v1087 = vld [vmem:[%s1 + $0x98] sm:$0xf]
      %v1088 = vld [vmem:[%s1 + $0x9c] sm:$0xf]
      %v1089 = vld [vmem:[%s1 + $0xa0] sm:$0xf]
      %v1090 = vld [vmem:[%s1 + $0xa4] sm:$0xf]
      %v1091 = vld [vmem:[%s1 + $0xa8] sm:$0xf]
      %v1092 = vld [vmem:[%s1 + $0xac] sm:$0xf]
      %v1093 = vld [vmem:[%s1 + $0xb0] sm:$0xf]
      %v1094 = vld [vmem:[%s1 + $0xb4] sm:$0xf]
      %v1095 = vld [vmem:[%s1 + $0xb8] sm:$0xf]
      %v1096 = vld [vmem:[%s1 + $0xbc] sm:$0xf]
      %v1097 = vld [vmem:[%s2] sm:$0xf]
      %v1098 = vld [vmem:[%s2 + $0x4] sm:$0xf]
      %v1099 = vld [vmem:[%s2 + $0x8] sm:$0xf]
      %v1100 = vld [vmem:[%s2 + $0xc] sm:$0xf]
      %v1101 = vld [vmem:[%s2 + $0x10] sm:$0xf]
      %v1102 = vld [vmem:[%s2 + $0x14] sm:$0xf]
      %v1103 = vld [vmem:[%s2 + $0x18] sm:$0xf]
      %v1104 = vld [vmem:[%s2 + $0x1c] sm:$0xf]
      %v1105 = vld [vmem:[%s2 + $0x20] sm:$0xf]
      %v1106 = vld [vmem:[%s2 + $0x24] sm:$0xf]
      %v1107 = vld [vmem:[%s2 + $0x28] sm:$0xf]
      %v1108 = vld [vmem:[%s2 + $0x2c] sm:$0xf]
      %v1109 = vld [vmem:[%s2 + $0x30] sm:$0xf]
      %v1110 = vld [vmem:[%s2 + $0x34] sm:$0xf]
      %v1111 = vld [vmem:[%s2 + $0x38] sm:$0xf]
      %v1112 = vld [vmem:[%s2 + $0x3c] sm:$0xf]
      %v1113 = vld [vmem:[%s2 + $0x40] sm:$0xf]
      %v1114 = vld [vmem:[%s2 + $0x44] sm:$0xf]
      %v1115 = vld [vmem:[%s2 + $0x48] sm:$0xf]
      %v1116 = vld [vmem:[%s2 + $0x4c] sm:$0xf]
      %v1117 = vld [vmem:[%s2 + $0x50] sm:$0xf]
      %v1118 = vld [vmem:[%s2 + $0x54] sm:$0xf]
      %v1119 = vld [vmem:[%s2 + $0x58] sm:$0xf]
      %v1120 = vld [vmem:[%s2 + $0x5c] sm:$0xf]
      %v1121 = vld [vmem:[%s2 + $0x60] sm:$0xf]
      %v1122 = vld [vmem:[%s2 + $0x64] sm:$0xf]
      %v1123 = vld [vmem:[%s2 + $0x68] sm:$0xf]
      %v1124 = vld [vmem:[%s2 + $0x6c] sm:$0xf]
      %v1125 = vld [vmem:[%s2 + $0x70] sm:$0xf]
      %v1126 = vld [vmem:[%s2 + $0x74] sm:$0xf]
      %v1127 = vld [vmem:[%s2 + $0x78] sm:$0xf]
      %v1128 = vld [vmem:[%s2 + $0x7c] sm:$0xf]
      %v1129 = vld [vmem:[%s2 + $0x80] sm:$0xf]
      %v1130 = vld [vmem:[%s2 + $0x84] sm:$0xf]
      %v1131 = vld [vmem:[%s2 + $0x88] sm:$0xf]
      %v1132 = vld [vmem:[%s2 + $0x8c] sm:$0xf]
      %v1133 = vld [vmem:[%s2 + $0x90] sm:$0xf]
      %v1134 = vld [vmem:[%s2 + $0x94] sm:$0xf]
      %v1135 = vld [vmem:[%s2 + $0x98] sm:$0xf]
      %v1136 = vld [vmem:[%s2 + $0x9c] sm:$0xf]
      %v1137 = vld [vmem:[%s2 + $0xa0] sm:$0xf]
      %v1138 = vld [vmem:[%s2 + $0xa4] sm:$0xf]
      %v1139 = vld [vmem:[%s2 + $0xa8] sm:$0xf]
      %v1140 = vld [vmem:[%s2 + $0xac] sm:$0xf]
      %v1141 = vld [vmem:[%s2 + $0xb0] sm:$0xf]
      %v1142 = vld [vmem:[%s2 + $0xb4] sm:$0xf]
      %v1143 = vld [vmem:[%s2 + $0xb8] sm:$0xf]
      %v1144 = vld [vmem:[%s2 + $0xbc] sm:$0xf]
      %v1193 = vunpack.c.l.b16 %v1097
      %v1194 = vunpack.c.l.b16 %v1098
      %v1195 = vunpack.c.l.b16 %v1099
      %v1196 = vunpack.c.l.b16 %v1100
      %v1197 = vunpack.c.l.b16 %v1101
      %v1198 = vunpack.c.l.b16 %v1102
      %v1199 = vunpack.c.l.b16 %v1103
      %v1200 = vunpack.c.l.b16 %v1104
      %v1201 = vunpack.c.l.b16 %v1105
      %v1202 = vunpack.c.l.b16 %v1106
      %v1203 = vunpack.c.l.b16 %v1107
      %v1204 = vunpack.c.l.b16 %v1108
      %v1205 = vunpack.c.l.b16 %v1109
      %v1206 = vunpack.c.l.b16 %v1110
      %v1207 = vunpack.c.l.b16 %v1111
      %v1208 = vunpack.c.l.b16 %v1112
      %v1209 = vunpack.c.l.b16 %v1113
      %v1210 = vunpack.c.l.b16 %v1114
      %v1211 = vunpack.c.l.b16 %v1115
      %v1212 = vunpack.c.l.b16 %v1116
      %v1213 = vunpack.c.l.b16 %v1117
      %v1214 = vunpack.c.l.b16 %v1118
      %v1215 = vunpack.c.l.b16 %v1119
      %v1216 = vunpack.c.l.b16 %v1120
      %v1217 = vunpack.c.l.b16 %v1121
      %v1218 = vunpack.c.l.b16 %v1122
      %v1219 = vunpack.c.l.b16 %v1123
      %v1220 = vunpack.c.l.b16 %v1124
      %v1221 = vunpack.c.l.b16 %v1125
      %v1222 = vunpack.c.l.b16 %v1126
      %v1223 = vunpack.c.l.b16 %v1127
      %v1224 = vunpack.c.l.b16 %v1128
      %v1225 = vunpack.c.l.b16 %v1129
      %v1226 = vunpack.c.l.b16 %v1130
      %v1227 = vunpack.c.l.b16 %v1131
      %v1228 = vunpack.c.l.b16 %v1132
      %v1229 = vunpack.c.l.b16 %v1133
      %v1230 = vunpack.c.l.b16 %v1134
      %v1231 = vunpack.c.l.b16 %v1135
      %v1232 = vunpack.c.l.b16 %v1136
      %v1233 = vunpack.c.l.b16 %v1137
      %v1234 = vunpack.c.l.b16 %v1138
      %v1235 = vunpack.c.l.b16 %v1139
      %v1236 = vunpack.c.l.b16 %v1140
      %v1237 = vunpack.c.l.b16 %v1141
      %v1238 = vunpack.c.l.b16 %v1142
      %v1239 = vunpack.c.l.b16 %v1143
      %v1240 = vunpack.c.l.b16 %v1144
      %v1241 = vpack.c.b16 %v1194, %v1193
      %v1242 = vpack.c.b16 %v1196, %v1195
      %v1243 = vpack.c.b16 %v1198, %v1197
      %v1244 = vpack.c.b16 %v1200, %v1199
      %v1245 = vpack.c.b16 %v1202, %v1201
      %v1246 = vpack.c.b16 %v1204, %v1203
      %v1247 = vpack.c.b16 %v1206, %v1205
      %v1248 = vpack.c.b16 %v1208, %v1207
      %v1249 = vpack.c.b16 %v1210, %v1209
      %v1250 = vpack.c.b16 %v1212, %v1211
      %v1251 = vpack.c.b16 %v1214, %v1213
      %v1252 = vpack.c.b16 %v1216, %v1215
      %v1253 = vpack.c.b16 %v1218, %v1217
      %v1254 = vpack.c.b16 %v1220, %v1219
      %v1255 = vpack.c.b16 %v1222, %v1221
      %v1256 = vpack.c.b16 %v1224, %v1223
      %v1257 = vpack.c.b16 %v1226, %v1225
      %v1258 = vpack.c.b16 %v1228, %v1227
      %v1259 = vpack.c.b16 %v1230, %v1229
      %v1260 = vpack.c.b16 %v1232, %v1231
      %v1261 = vpack.c.b16 %v1234, %v1233
      %v1262 = vpack.c.b16 %v1236, %v1235
      %v1263 = vpack.c.b16 %v1238, %v1237
      %v1264 = vpack.c.b16 %v1240, %v1239
      %1289 = vmatpush.bf16.msra.mxu0 %v1248
      %1290 = vmatpush.bf16.msra.mxu0 %v1247
      %1291 = vmatpush.bf16.msra.mxu0 %v1246
      %1292 = vmatpush.bf16.msra.mxu0 %v1245
      %1293 = vmatpush.bf16.msra.mxu0 %v1244
      %1294 = vmatpush.bf16.msra.mxu0 %v1243
      %1295 = vmatpush.bf16.msra.mxu0 %v1242
      %1296 = vmatpush.bf16.msra.mxu0 %v1241
      %1297 = vmatmul.bf16.gmra.mxu0 %v1025
      %v1298 = vpop.f32.mrf.mxu0
      %v1299 = vadd.f32 0.0, %v1298
      %v1300 = vpop.f32.mrf.mxu0
      %v1301 = vadd.f32 0.0, %v1300
      %1302 = vmatmul.bf16.gmra.mxu0 %v1028
      %v1303 = vpop.f32.mrf.mxu0
      %v1304 = vadd.f32 0.0, %v1303
      %v1305 = vpop.f32.mrf.mxu0
      %v1306 = vadd.f32 0.0, %v1305
      %1307 = vmatmul.bf16.gmra.mxu0 %v1031
      %v1308 = vpop.f32.mrf.mxu0
      %v1309 = vadd.f32 0.0, %v1308
      %v1310 = vpop.f32.mrf.mxu0
      %v1311 = vadd.f32 0.0, %v1310
      %1312 = vmatmul.bf16.gmra.mxu0 %v1034
      %v1313 = vpop.f32.mrf.mxu0
      %v1314 = vadd.f32 0.0, %v1313
      %v1315 = vpop.f32.mrf.mxu0
      %v1316 = vadd.f32 0.0, %v1315
      %1317 = vmatmul.bf16.gmra.mxu0 %v1037
      %v1318 = vpop.f32.mrf.mxu0
      %v1319 = vadd.f32 0.0, %v1318
      %v1320 = vpop.f32.mrf.mxu0
      %v1321 = vadd.f32 0.0, %v1320
      %1322 = vmatmul.bf16.gmra.mxu0 %v1040
      %v1323 = vpop.f32.mrf.mxu0
      %v1324 = vadd.f32 0.0, %v1323
      %v1325 = vpop.f32.mrf.mxu0
      %v1326 = vadd.f32 0.0, %v1325
      %1327 = vmatmul.bf16.gmra.mxu0 %v1043
      %v1328 = vpop.f32.mrf.mxu0
      %v1329 = vadd.f32 0.0, %v1328
      %v1330 = vpop.f32.mrf.mxu0
      %v1331 = vadd.f32 0.0, %v1330
      %1332 = vmatmul.bf16.gmra.mxu0 %v1046
      %v1333 = vpop.f32.mrf.mxu0
      %v1334 = vadd.f32 0.0, %v1333
      %v1335 = vpop.f32.mrf.mxu0
      %v1336 = vadd.f32 0.0, %v1335
      %1337 = vdwg.mxu0
      %1338 = vmatpush.bf16.msra.mxu0 %v1256
      %1339 = vmatpush.bf16.msra.mxu0 %v1255
      %1340 = vmatpush.bf16.msra.mxu0 %v1254
      %1341 = vmatpush.bf16.msra.mxu0 %v1253
      %1342 = vmatpush.bf16.msra.mxu0 %v1252
      %1343 = vmatpush.bf16.msra.mxu0 %v1251
      %1344 = vmatpush.bf16.msra.mxu0 %v1250
      %1345 = vmatpush.bf16.msra.mxu0 %v1249
      %1346 = vmatmul.bf16.gmra.mxu0 %v1026
      %v1347 = vpop.f32.mrf.mxu0
      %v1348 = vadd.f32 %v1299, %v1347
      %v1349 = vpop.f32.mrf.mxu0
      %v1350 = vadd.f32 %v1301, %v1349
      %1351 = vmatmul.bf16.gmra.mxu0 %v1029
      %v1352 = vpop.f32.mrf.mxu0
      %v1353 = vadd.f32 %v1304, %v1352
      %v1354 = vpop.f32.mrf.mxu0
      %v1355 = vadd.f32 %v1306, %v1354
      %1356 = vmatmul.bf16.gmra.mxu0 %v1032
      %v1357 = vpop.f32.mrf.mxu0
      %v1358 = vadd.f32 %v1309, %v1357
      %v1359 = vpop.f32.mrf.mxu0
      %v1360 = vadd.f32 %v1311, %v1359
      %1361 = vmatmul.bf16.gmra.mxu0 %v1035
      %v1362 = vpop.f32.mrf.mxu0
      %v1363 = vadd.f32 %v1314, %v1362
      %v1364 = vpop.f32.mrf.mxu0
      %v1365 = vadd.f32 %v1316, %v1364
      %1366 = vmatmul.bf16.gmra.mxu0 %v1038
      %v1367 = vpop.f32.mrf.mxu0
      %v1368 = vadd.f32 %v1319, %v1367
      %v1369 = vpop.f32.mrf.mxu0
      %v1370 = vadd.f32 %v1321, %v1369
      %1371 = vmatmul.bf16.gmra.mxu0 %v1041
      %v1372 = vpop.f32.mrf.mxu0
      %v1373 = vadd.f32 %v1324, %v1372
      %v1374 = vpop.f32.mrf.mxu0
      %v1375 = vadd.f32 %v1326, %v1374
      %1376 = vmatmul.bf16.gmra.mxu0 %v1044
      %v1377 = vpop.f32.mrf.mxu0
      %v1378 = vadd.f32 %v1329, %v1377
      %v1379 = vpop.f32.mrf.mxu0
      %v1380 = vadd.f32 %v1331, %v1379
      %1381 = vmatmul.bf16.gmra.mxu0 %v1047
      %v1382 = vpop.f32.mrf.mxu0
      %v1383 = vadd.f32 %v1334, %v1382
      %v1384 = vpop.f32.mrf.mxu0
      %v1385 = vadd.f32 %v1336, %v1384
      %1386 = vdwg.mxu0
      %1387 = vmatpush.bf16.msra.mxu0 %v1264
      %1388 = vmatpush.bf16.msra.mxu0 %v1263
      %1389 = vmatpush.bf16.msra.mxu0 %v1262
      %1390 = vmatpush.bf16.msra.mxu0 %v1261
      %1391 = vmatpush.bf16.msra.mxu0 %v1260
      %1392 = vmatpush.bf16.msra.mxu0 %v1259
      %1393 = vmatpush.bf16.msra.mxu0 %v1258
      %1394 = vmatpush.bf16.msra.mxu0 %v1257
      %1395 = vmatmul.bf16.gmra.mxu0 %v1027
      %v1396 = vpop.f32.mrf.mxu0
      %v1397 = vadd.f32 %v1348, %v1396
      %v1398 = vpop.f32.mrf.mxu0
      %v1399 = vadd.f32 %v1350, %v1398
      %1400 = vmatmul.bf16.gmra.mxu0 %v1030
      %v1401 = vpop.f32.mrf.mxu0
      %v1402 = vadd.f32 %v1353, %v1401
      %v1403 = vpop.f32.mrf.mxu0
      %v1404 = vadd.f32 %v1355, %v1403
      %1405 = vmatmul.bf16.gmra.mxu0 %v1033
      %v1406 = vpop.f32.mrf.mxu0
      %v1407 = vadd.f32 %v1358, %v1406
      %v1408 = vpop.f32.mrf.mxu0
      %v1409 = vadd.f32 %v1360, %v1408
      %1410 = vmatmul.bf16.gmra.mxu0 %v1036
      %v1411 = vpop.f32.mrf.mxu0
      %v1412 = vadd.f32 %v1363, %v1411
      %v1413 = vpop.f32.mrf.mxu0
      %v1414 = vadd.f32 %v1365, %v1413
      %1415 = vmatmul.bf16.gmra.mxu0 %v1039
      %v1416 = vpop.f32.mrf.mxu0
      %v1417 = vadd.f32 %v1368, %v1416
      %v1418 = vpop.f32.mrf.mxu0
      %v1419 = vadd.f32 %v1370, %v1418
      %1420 = vmatmul.bf16.gmra.mxu0 %v1042
      %v1421 = vpop.f32.mrf.mxu0
      %v1422 = vadd.f32 %v1373, %v1421
      %v1423 = vpop.f32.mrf.mxu0
      %v1424 = vadd.f32 %v1375, %v1423
      %1425 = vmatmul.bf16.gmra.mxu0 %v1045
      %v1426 = vpop.f32.mrf.mxu0
      %v1427 = vadd.f32 %v1378, %v1426
      %v1428 = vpop.f32.mrf.mxu0
      %v1429 = vadd.f32 %v1380, %v1428
      %1430 = vmatmul.bf16.gmra.mxu0 %v1048
      %v1431 = vpop.f32.mrf.mxu0
      %v1432 = vadd.f32 %v1383, %v1431
      %v1433 = vpop.f32.mrf.mxu0
      %v1434 = vadd.f32 %v1385, %v1433
      %1435 = vdwg.mxu0
      %v1484 = vunpack.c.l.b16 %v1049
      %v1485 = vunpack.c.l.b16 %v1050
      %v1486 = vunpack.c.l.b16 %v1051
      %v1487 = vunpack.c.l.b16 %v1052
      %v1488 = vunpack.c.l.b16 %v1053
      %v1489 = vunpack.c.l.b16 %v1054
      %v1490 = vunpack.c.l.b16 %v1055
      %v1491 = vunpack.c.l.b16 %v1056
      %v1492 = vunpack.c.l.b16 %v1057
      %v1493 = vunpack.c.l.b16 %v1058
      %v1494 = vunpack.c.l.b16 %v1059
      %v1495 = vunpack.c.l.b16 %v1060
      %v1496 = vunpack.c.l.b16 %v1061
      %v1497 = vunpack.c.l.b16 %v1062
      %v1498 = vunpack.c.l.b16 %v1063
      %v1499 = vunpack.c.l.b16 %v1064
      %v1500 = vunpack.c.l.b16 %v1065
      %v1501 = vunpack.c.l.b16 %v1066
      %v1502 = vunpack.c.l.b16 %v1067
      %v1503 = vunpack.c.l.b16 %v1068
      %v1504 = vunpack.c.l.b16 %v1069
      %v1505 = vunpack.c.l.b16 %v1070
      %v1506 = vunpack.c.l.b16 %v1071
      %v1507 = vunpack.c.l.b16 %v1072
      %v1508 = vunpack.c.l.b16 %v1073
      %v1509 = vunpack.c.l.b16 %v1074
      %v1510 = vunpack.c.l.b16 %v1075
      %v1511 = vunpack.c.l.b16 %v1076
      %v1512 = vunpack.c.l.b16 %v1077
      %v1513 = vunpack.c.l.b16 %v1078
      %v1514 = vunpack.c.l.b16 %v1079
      %v1515 = vunpack.c.l.b16 %v1080
      %v1516 = vunpack.c.l.b16 %v1081
      %v1517 = vunpack.c.l.b16 %v1082
      %v1518 = vunpack.c.l.b16 %v1083
      %v1519 = vunpack.c.l.b16 %v1084
      %v1520 = vunpack.c.l.b16 %v1085
      %v1521 = vunpack.c.l.b16 %v1086
      %v1522 = vunpack.c.l.b16 %v1087
      %v1523 = vunpack.c.l.b16 %v1088
      %v1524 = vunpack.c.l.b16 %v1089
      %v1525 = vunpack.c.l.b16 %v1090
      %v1526 = vunpack.c.l.b16 %v1091
      %v1527 = vunpack.c.l.b16 %v1092
      %v1528 = vunpack.c.l.b16 %v1093
      %v1529 = vunpack.c.l.b16 %v1094
      %v1530 = vunpack.c.l.b16 %v1095
      %v1531 = vunpack.c.l.b16 %v1096
      %v1532 = vpack.c.b16 %v1485, %v1484
      %v1533 = vpack.c.b16 %v1487, %v1486
      %v1534 = vpack.c.b16 %v1489, %v1488
      %v1535 = vpack.c.b16 %v1491, %v1490
      %v1536 = vpack.c.b16 %v1493, %v1492
      %v1537 = vpack.c.b16 %v1495, %v1494
      %v1538 = vpack.c.b16 %v1497, %v1496
      %v1539 = vpack.c.b16 %v1499, %v1498
      %v1540 = vpack.c.b16 %v1501, %v1500
      %v1541 = vpack.c.b16 %v1503, %v1502
      %v1542 = vpack.c.b16 %v1505, %v1504
      %v1543 = vpack.c.b16 %v1507, %v1506
      %v1544 = vpack.c.b16 %v1509, %v1508
      %v1545 = vpack.c.b16 %v1511, %v1510
      %v1546 = vpack.c.b16 %v1513, %v1512
      %v1547 = vpack.c.b16 %v1515, %v1514
      %v1548 = vpack.c.b16 %v1517, %v1516
      %v1549 = vpack.c.b16 %v1519, %v1518
      %v1550 = vpack.c.b16 %v1521, %v1520
      %v1551 = vpack.c.b16 %v1523, %v1522
      %v1552 = vpack.c.b16 %v1525, %v1524
      %v1553 = vpack.c.b16 %v1527, %v1526
      %v1554 = vpack.c.b16 %v1529, %v1528
      %v1555 = vpack.c.b16 %v1531, %v1530
      %1580 = vmatpush.bf16.msra.mxu0 %v1539
      %1581 = vmatpush.bf16.msra.mxu0 %v1538
      %1582 = vmatpush.bf16.msra.mxu0 %v1537
      %1583 = vmatpush.bf16.msra.mxu0 %v1536
      %1584 = vmatpush.bf16.msra.mxu0 %v1535
      %1585 = vmatpush.bf16.msra.mxu0 %v1534
      %1586 = vmatpush.bf16.msra.mxu0 %v1533
      %1587 = vmatpush.bf16.msra.mxu0 %v1532
      %1588 = vmatmul.bf16.gmra.mxu0 %v1025
      %v1589 = vpop.f32.mrf.mxu0
      %v1590 = vadd.f32 %v1397, %v1589
      %v1591 = vpop.f32.mrf.mxu0
      %v1592 = vadd.f32 %v1399, %v1591
      %1593 = vmatmul.bf16.gmra.mxu0 %v1028
      %v1594 = vpop.f32.mrf.mxu0
      %v1595 = vadd.f32 %v1402, %v1594
      %v1596 = vpop.f32.mrf.mxu0
      %v1597 = vadd.f32 %v1404, %v1596
      %1598 = vmatmul.bf16.gmra.mxu0 %v1031
      %v1599 = vpop.f32.mrf.mxu0
      %v1600 = vadd.f32 %v1407, %v1599
      %v1601 = vpop.f32.mrf.mxu0
      %v1602 = vadd.f32 %v1409, %v1601
      %1603 = vmatmul.bf16.gmra.mxu0 %v1034
      %v1604 = vpop.f32.mrf.mxu0
      %v1605 = vadd.f32 %v1412, %v1604
      %v1606 = vpop.f32.mrf.mxu0
      %v1607 = vadd.f32 %v1414, %v1606
      %1608 = vmatmul.bf16.gmra.mxu0 %v1037
      %v1609 = vpop.f32.mrf.mxu0
      %v1610 = vadd.f32 %v1417, %v1609
      %v1611 = vpop.f32.mrf.mxu0
      %v1612 = vadd.f32 %v1419, %v1611
      %1613 = vmatmul.bf16.gmra.mxu0 %v1040
      %v1614 = vpop.f32.mrf.mxu0
      %v1615 = vadd.f32 %v1422, %v1614
      %v1616 = vpop.f32.mrf.mxu0
      %v1617 = vadd.f32 %v1424, %v1616
      %1618 = vmatmul.bf16.gmra.mxu0 %v1043
      %v1619 = vpop.f32.mrf.mxu0
      %v1620 = vadd.f32 %v1427, %v1619
      %v1621 = vpop.f32.mrf.mxu0
      %v1622 = vadd.f32 %v1429, %v1621
      %1623 = vmatmul.bf16.gmra.mxu0 %v1046
      %v1624 = vpop.f32.mrf.mxu0
      %v1625 = vadd.f32 %v1432, %v1624
      %v1626 = vpop.f32.mrf.mxu0
      %v1627 = vadd.f32 %v1434, %v1626
      %1628 = vdwg.mxu0
      %1629 = vmatpush.bf16.msra.mxu0 %v1547
      %1630 = vmatpush.bf16.msra.mxu0 %v1546
      %1631 = vmatpush.bf16.msra.mxu0 %v1545
      %1632 = vmatpush.bf16.msra.mxu0 %v1544
      %1633 = vmatpush.bf16.msra.mxu0 %v1543
      %1634 = vmatpush.bf16.msra.mxu0 %v1542
      %1635 = vmatpush.bf16.msra.mxu0 %v1541
      %1636 = vmatpush.bf16.msra.mxu0 %v1540
      %1637 = vmatmul.bf16.gmra.mxu0 %v1026
      %v1638 = vpop.f32.mrf.mxu0
      %v1639 = vadd.f32 %v1590, %v1638
      %v1640 = vpop.f32.mrf.mxu0
      %v1641 = vadd.f32 %v1592, %v1640
      %1642 = vmatmul.bf16.gmra.mxu0 %v1029
      %v1643 = vpop.f32.mrf.mxu0
      %v1644 = vadd.f32 %v1595, %v1643
      %v1645 = vpop.f32.mrf.mxu0
      %v1646 = vadd.f32 %v1597, %v1645
      %1647 = vmatmul.bf16.gmra.mxu0 %v1032
      %v1648 = vpop.f32.mrf.mxu0
      %v1649 = vadd.f32 %v1600, %v1648
      %v1650 = vpop.f32.mrf.mxu0
      %v1651 = vadd.f32 %v1602, %v1650
      %1652 = vmatmul.bf16.gmra.mxu0 %v1035
      %v1653 = vpop.f32.mrf.mxu0
      %v1654 = vadd.f32 %v1605, %v1653
      %v1655 = vpop.f32.mrf.mxu0
      %v1656 = vadd.f32 %v1607, %v1655
      %1657 = vmatmul.bf16.gmra.mxu0 %v1038
      %v1658 = vpop.f32.mrf.mxu0
      %v1659 = vadd.f32 %v1610, %v1658
      %v1660 = vpop.f32.mrf.mxu0
      %v1661 = vadd.f32 %v1612, %v1660
      %1662 = vmatmul.bf16.gmra.mxu0 %v1041
      %v1663 = vpop.f32.mrf.mxu0
      %v1664 = vadd.f32 %v1615, %v1663
      %v1665 = vpop.f32.mrf.mxu0
      %v1666 = vadd.f32 %v1617, %v1665
      %1667 = vmatmul.bf16.gmra.mxu0 %v1044
      %v1668 = vpop.f32.mrf.mxu0
      %v1669 = vadd.f32 %v1620, %v1668
      %v1670 = vpop.f32.mrf.mxu0
      %v1671 = vadd.f32 %v1622, %v1670
      %1672 = vmatmul.bf16.gmra.mxu0 %v1047
      %v1673 = vpop.f32.mrf.mxu0
      %v1674 = vadd.f32 %v1625, %v1673
      %v1675 = vpop.f32.mrf.mxu0
      %v1676 = vadd.f32 %v1627, %v1675
      %1677 = vdwg.mxu0
      %1678 = vmatpush.bf16.msra.mxu0 %v1555
      %1679 = vmatpush.bf16.msra.mxu0 %v1554
      %1680 = vmatpush.bf16.msra.mxu0 %v1553
      %1681 = vmatpush.bf16.msra.mxu0 %v1552
      %1682 = vmatpush.bf16.msra.mxu0 %v1551
      %1683 = vmatpush.bf16.msra.mxu0 %v1550
      %1684 = vmatpush.bf16.msra.mxu0 %v1549
      %1685 = vmatpush.bf16.msra.mxu0 %v1548
      %1686 = vmatmul.bf16.gmra.mxu0 %v1027
      %v1687 = vpop.f32.mrf.mxu0
      %v1688 = vadd.f32 %v1639, %v1687
      %v1689 = vpop.f32.mrf.mxu0
      %v1690 = vadd.f32 %v1641, %v1689
      %1691 = vmatmul.bf16.gmra.mxu0 %v1030
      %v1692 = vpop.f32.mrf.mxu0
      %v1693 = vadd.f32 %v1644, %v1692
      %v1694 = vpop.f32.mrf.mxu0
      %v1695 = vadd.f32 %v1646, %v1694
      %1696 = vmatmul.bf16.gmra.mxu0 %v1033
      %v1697 = vpop.f32.mrf.mxu0
      %v1698 = vadd.f32 %v1649, %v1697
      %v1699 = vpop.f32.mrf.mxu0
      %v1700 = vadd.f32 %v1651, %v1699
      %1701 = vmatmul.bf16.gmra.mxu0 %v1036
      %v1702 = vpop.f32.mrf.mxu0
      %v1703 = vadd.f32 %v1654, %v1702
      %v1704 = vpop.f32.mrf.mxu0
      %v1705 = vadd.f32 %v1656, %v1704
      %1706 = vmatmul.bf16.gmra.mxu0 %v1039
      %v1707 = vpop.f32.mrf.mxu0
      %v1708 = vadd.f32 %v1659, %v1707
      %v1709 = vpop.f32.mrf.mxu0
      %v1710 = vadd.f32 %v1661, %v1709
      %1711 = vmatmul.bf16.gmra.mxu0 %v1042
      %v1712 = vpop.f32.mrf.mxu0
      %v1713 = vadd.f32 %v1664, %v1712
      %v1714 = vpop.f32.mrf.mxu0
      %v1715 = vadd.f32 %v1666, %v1714
      %1716 = vmatmul.bf16.gmra.mxu0 %v1045
      %v1717 = vpop.f32.mrf.mxu0
      %v1718 = vadd.f32 %v1669, %v1717
      %v1719 = vpop.f32.mrf.mxu0
      %v1720 = vadd.f32 %v1671, %v1719
      %1721 = vmatmul.bf16.gmra.mxu0 %v1048
      %v1722 = vpop.f32.mrf.mxu0
      %v1723 = vadd.f32 %v1674, %v1722
      %v1724 = vpop.f32.mrf.mxu0
      %v1725 = vadd.f32 %v1676, %v1724
      %1726 = vdwg.mxu0
      %v1727 = vpack.c.bf16 %v228, %v228
      %v1728 = vpack.c.bf16 %v229, %v229
      %v1729 = vpack.c.bf16 %v230, %v230
      %v1730 = vpack.c.bf16 %v231, %v231
      %v1731 = vpack.c.bf16 %v232, %v232
      %v1732 = vpack.c.bf16 %v233, %v233
      %v1733 = vpack.c.bf16 %v234, %v234
      %v1734 = vpack.c.bf16 %v235, %v235
      %v1735 = vpack.c.bf16 %v236, %v236
      %v1736 = vpack.c.bf16 %v237, %v237
      %v1737 = vpack.c.bf16 %v238, %v238
      %v1738 = vpack.c.bf16 %v239, %v239
      %v1739 = vpack.c.bf16 %v240, %v240
      %v1740 = vpack.c.bf16 %v241, %v241
      %v1741 = vpack.c.bf16 %v242, %v242
      %v1742 = vpack.c.bf16 %v243, %v243
      %v1743 = vunpack.c.l.bf16 %v1727
      %v1744 = vunpack.c.l.bf16 %v1728
      %v1745 = vunpack.c.l.bf16 %v1729
      %v1746 = vunpack.c.l.bf16 %v1730
      %v1747 = vunpack.c.l.bf16 %v1731
      %v1748 = vunpack.c.l.bf16 %v1732
      %v1749 = vunpack.c.l.bf16 %v1733
      %v1750 = vunpack.c.l.bf16 %v1734
      %v1751 = vunpack.c.l.bf16 %v1735
      %v1752 = vunpack.c.l.bf16 %v1736
      %v1753 = vunpack.c.l.bf16 %v1737
      %v1754 = vunpack.c.l.bf16 %v1738
      %v1755 = vunpack.c.l.bf16 %v1739
      %v1756 = vunpack.c.l.bf16 %v1740
      %v1757 = vunpack.c.l.bf16 %v1741
      %v1758 = vunpack.c.l.bf16 %v1742
      %v1759 = vsub.f32 %v228, %v1743
      %v1760 = vsub.f32 %v229, %v1744
      %v1761 = vsub.f32 %v230, %v1745
      %v1762 = vsub.f32 %v231, %v1746
      %v1763 = vsub.f32 %v232, %v1747
      %v1764 = vsub.f32 %v233, %v1748
      %v1765 = vsub.f32 %v234, %v1749
      %v1766 = vsub.f32 %v235, %v1750
      %v1767 = vsub.f32 %v236, %v1751
      %v1768 = vsub.f32 %v237, %v1752
      %v1769 = vsub.f32 %v238, %v1753
      %v1770 = vsub.f32 %v239, %v1754
      %v1771 = vsub.f32 %v240, %v1755
      %v1772 = vsub.f32 %v241, %v1756
      %v1773 = vsub.f32 %v242, %v1757
      %v1774 = vsub.f32 %v243, %v1758
      %v1775 = vld [vmem:[%s3] sm:$0x7]
      %1777 = vset.pattern.permute.xlu0 0
      %1778 = vperm.xlu0 %1777, %v1759
      %v1779 = vpop.permute.xlu0 %1778
      %1782 = vset.pattern.permute.xlu0 0
      %1783 = vperm.xlu0 %1782, %v1760
      %v1784 = vpop.permute.xlu0 %1783
      %1787 = vset.pattern.permute.xlu0 0
      %1788 = vperm.xlu0 %1787, %v1761
      %v1789 = vpop.permute.xlu0 %1788
      %1792 = vset.pattern.permute.xlu0 0
      %1793 = vperm.xlu0 %1792, %v1762
      %v1794 = vpop.permute.xlu0 %1793
      %1797 = vset.pattern.permute.xlu0 0
      %1798 = vperm.xlu0 %1797, %v1763
      %v1799 = vpop.permute.xlu0 %1798
      %1802 = vset.pattern.permute.xlu0 0
      %1803 = vperm.xlu0 %1802, %v1764
      %v1804 = vpop.permute.xlu0 %1803
      %1807 = vset.pattern.permute.xlu0 0
      %1808 = vperm.xlu0 %1807, %v1765
      %v1809 = vpop.permute.xlu0 %1808
      %1812 = vset.pattern.permute.xlu0 0
      %1813 = vperm.xlu0 %1812, %v1766
      %v1814 = vpop.permute.xlu0 %1813
      %1817 = vset.pattern.permute.xlu0 0
      %1818 = vperm.xlu0 %1817, %v1767
      %v1819 = vpop.permute.xlu0 %1818
      %1822 = vset.pattern.permute.xlu0 0
      %1823 = vperm.xlu0 %1822, %v1768
      %v1824 = vpop.permute.xlu0 %1823
      %1827 = vset.pattern.permute.xlu0 0
      %1828 = vperm.xlu0 %1827, %v1769
      %v1829 = vpop.permute.xlu0 %1828
      %1832 = vset.pattern.permute.xlu0 0
      %1833 = vperm.xlu0 %1832, %v1770
      %v1834 = vpop.permute.xlu0 %1833
      %1837 = vset.pattern.permute.xlu0 0
      %1838 = vperm.xlu0 %1837, %v1771
      %v1839 = vpop.permute.xlu0 %1838
      %1842 = vset.pattern.permute.xlu0 0
      %1843 = vperm.xlu0 %1842, %v1772
      %v1844 = vpop.permute.xlu0 %1843
      %1847 = vset.pattern.permute.xlu0 0
      %1848 = vperm.xlu0 %1847, %v1773
      %v1849 = vpop.permute.xlu0 %1848
      %1852 = vset.pattern.permute.xlu0 0
      %1853 = vperm.xlu0 %1852, %v1774
      %v1854 = vpop.permute.xlu0 %1853
      %v1856 = vperm.slane %v1775, 0
      %v1857 = vmul.f32 %v1779, %v1856
      %v1858 = vmul.f32 %v1784, %v1856
      %v1859 = vmul.f32 %v1789, %v1856
      %v1860 = vmul.f32 %v1794, %v1856
      %v1861 = vmul.f32 %v1799, %v1856
      %v1862 = vmul.f32 %v1804, %v1856
      %v1863 = vmul.f32 %v1809, %v1856
      %v1864 = vmul.f32 %v1814, %v1856
      %v1865 = vmul.f32 %v1819, %v1856
      %v1866 = vmul.f32 %v1824, %v1856
      %v1867 = vmul.f32 %v1829, %v1856
      %v1868 = vmul.f32 %v1834, %v1856
      %v1869 = vmul.f32 %v1839, %v1856
      %v1870 = vmul.f32 %v1844, %v1856
      %v1871 = vmul.f32 %v1849, %v1856
      %v1872 = vmul.f32 %v1854, %v1856
      %1873 = vset.pattern.permute.xlu0 1
      %1874 = vperm.xlu0 %1873, %v1759
      %v1875 = vpop.permute.xlu0 %1874
      %1877 = vset.pattern.permute.xlu0 1
      %1878 = vperm.xlu0 %1877, %v1760
      %v1879 = vpop.permute.xlu0 %1878
      %1881 = vset.pattern.permute.xlu0 1
      %1882 = vperm.xlu0 %1881, %v1761
      %v1883 = vpop.permute.xlu0 %1882
      %1885 = vset.pattern.permute.xlu0 1
      %1886 = vperm.xlu0 %1885, %v1762
      %v1887 = vpop.permute.xlu0 %1886
      %1889 = vset.pattern.permute.xlu0 1
      %1890 = vperm.xlu0 %1889, %v1763
      %v1891 = vpop.permute.xlu0 %1890
      %1893 = vset.pattern.permute.xlu0 1
      %1894 = vperm.xlu0 %1893, %v1764
      %v1895 = vpop.permute.xlu0 %1894
      %1897 = vset.pattern.permute.xlu0 1
      %1898 = vperm.xlu0 %1897, %v1765
      %v1899 = vpop.permute.xlu0 %1898
      %1901 = vset.pattern.permute.xlu0 1
      %1902 = vperm.xlu0 %1901, %v1766
      %v1903 = vpop.permute.xlu0 %1902
      %1905 = vset.pattern.permute.xlu0 1
      %1906 = vperm.xlu0 %1905, %v1767
      %v1907 = vpop.permute.xlu0 %1906
      %1909 = vset.pattern.permute.xlu0 1
      %1910 = vperm.xlu0 %1909, %v1768
      %v1911 = vpop.permute.xlu0 %1910
      %1913 = vset.pattern.permute.xlu0 1
      %1914 = vperm.xlu0 %1913, %v1769
      %v1915 = vpop.permute.xlu0 %1914
      %1917 = vset.pattern.permute.xlu0 1
      %1918 = vperm.xlu0 %1917, %v1770
      %v1919 = vpop.permute.xlu0 %1918
      %1921 = vset.pattern.permute.xlu0 1
      %1922 = vperm.xlu0 %1921, %v1771
      %v1923 = vpop.permute.xlu0 %1922
      %1925 = vset.pattern.permute.xlu0 1
      %1926 = vperm.xlu0 %1925, %v1772
      %v1927 = vpop.permute.xlu0 %1926
      %1929 = vset.pattern.permute.xlu0 1
      %1930 = vperm.xlu0 %1929, %v1773
      %v1931 = vpop.permute.xlu0 %1930
      %1933 = vset.pattern.permute.xlu0 1
      %1934 = vperm.xlu0 %1933, %v1774
      %v1935 = vpop.permute.xlu0 %1934
      %v1937 = vperm.slane %v1775, 1
      %v1938 = vmul.f32 %v1875, %v1937
      %v1939 = vmul.f32 %v1879, %v1937
      %v1940 = vmul.f32 %v1883, %v1937
      %v1941 = vmul.f32 %v1887, %v1937
      %v1942 = vmul.f32 %v1891, %v1937
      %v1943 = vmul.f32 %v1895, %v1937
      %v1944 = vmul.f32 %v1899, %v1937
      %v1945 = vmul.f32 %v1903, %v1937
      %v1946 = vmul.f32 %v1907, %v1937
      %v1947 = vmul.f32 %v1911, %v1937
      %v1948 = vmul.f32 %v1915, %v1937
      %v1949 = vmul.f32 %v1919, %v1937
      %v1950 = vmul.f32 %v1923, %v1937
      %v1951 = vmul.f32 %v1927, %v1937
      %v1952 = vmul.f32 %v1931, %v1937
      %v1953 = vmul.f32 %v1935, %v1937
      %v1954 = vadd.f32 %v1857, %v1938
      %v1955 = vadd.f32 %v1858, %v1939
      %v1956 = vadd.f32 %v1859, %v1940
      %v1957 = vadd.f32 %v1860, %v1941
      %v1958 = vadd.f32 %v1861, %v1942
      %v1959 = vadd.f32 %v1862, %v1943
      %v1960 = vadd.f32 %v1863, %v1944
      %v1961 = vadd.f32 %v1864, %v1945
      %v1962 = vadd.f32 %v1865, %v1946
      %v1963 = vadd.f32 %v1866, %v1947
      %v1964 = vadd.f32 %v1867, %v1948
      %v1965 = vadd.f32 %v1868, %v1949
      %v1966 = vadd.f32 %v1869, %v1950
      %v1967 = vadd.f32 %v1870, %v1951
      %v1968 = vadd.f32 %v1871, %v1952
      %v1969 = vadd.f32 %v1872, %v1953
      %1970 = vset.pattern.permute.xlu0 2
      %1971 = vperm.xlu0 %1970, %v1759
      %v1972 = vpop.permute.xlu0 %1971
      %1974 = vset.pattern.permute.xlu0 2
      %1975 = vperm.xlu0 %1974, %v1760
      %v1976 = vpop.permute.xlu0 %1975
      %1978 = vset.pattern.permute.xlu0 2
      %1979 = vperm.xlu0 %1978, %v1761
      %v1980 = vpop.permute.xlu0 %1979
      %1982 = vset.pattern.permute.xlu0 2
      %1983 = vperm.xlu0 %1982, %v1762
      %v1984 = vpop.permute.xlu0 %1983
      %1986 = vset.pattern.permute.xlu0 2
      %1987 = vperm.xlu0 %1986, %v1763
      %v1988 = vpop.permute.xlu0 %1987
      %1990 = vset.pattern.permute.xlu0 2
      %1991 = vperm.xlu0 %1990, %v1764
      %v1992 = vpop.permute.xlu0 %1991
      %1994 = vset.pattern.permute.xlu0 2
      %1995 = vperm.xlu0 %1994, %v1765
      %v1996 = vpop.permute.xlu0 %1995
      %1998 = vset.pattern.permute.xlu0 2
      %1999 = vperm.xlu0 %1998, %v1766
      %v2000 = vpop.permute.xlu0 %1999
      %2002 = vset.pattern.permute.xlu0 2
      %2003 = vperm.xlu0 %2002, %v1767
      %v2004 = vpop.permute.xlu0 %2003
      %2006 = vset.pattern.permute.xlu0 2
      %2007 = vperm.xlu0 %2006, %v1768
      %v2008 = vpop.permute.xlu0 %2007
      %2010 = vset.pattern.permute.xlu0 2
      %2011 = vperm.xlu0 %2010, %v1769
      %v2012 = vpop.permute.xlu0 %2011
      %2014 = vset.pattern.permute.xlu0 2
      %2015 = vperm.xlu0 %2014, %v1770
      %v2016 = vpop.permute.xlu0 %2015
      %2018 = vset.pattern.permute.xlu0 2
      %2019 = vperm.xlu0 %2018, %v1771
      %v2020 = vpop.permute.xlu0 %2019
      %2022 = vset.pattern.permute.xlu0 2
      %2023 = vperm.xlu0 %2022, %v1772
      %v2024 = vpop.permute.xlu0 %2023
      %2026 = vset.pattern.permute.xlu0 2
      %2027 = vperm.xlu0 %2026, %v1773
      %v2028 = vpop.permute.xlu0 %2027
      %2030 = vset.pattern.permute.xlu0 2
      %2031 = vperm.xlu0 %2030, %v1774
      %v2032 = vpop.permute.xlu0 %2031
      %v2034 = vperm.slane %v1775, 2
      %v2035 = vmul.f32 %v1972, %v2034
      %v2036 = vmul.f32 %v1976, %v2034
      %v2037 = vmul.f32 %v1980, %v2034
      %v2038 = vmul.f32 %v1984, %v2034
      %v2039 = vmul.f32 %v1988, %v2034
      %v2040 = vmul.f32 %v1992, %v2034
      %v2041 = vmul.f32 %v1996, %v2034
      %v2042 = vmul.f32 %v2000, %v2034
      %v2043 = vmul.f32 %v2004, %v2034
      %v2044 = vmul.f32 %v2008, %v2034
      %v2045 = vmul.f32 %v2012, %v2034
      %v2046 = vmul.f32 %v2016, %v2034
      %v2047 = vmul.f32 %v2020, %v2034
      %v2048 = vmul.f32 %v2024, %v2034
      %v2049 = vmul.f32 %v2028, %v2034
      %v2050 = vmul.f32 %v2032, %v2034
      %v2051 = vadd.f32 %v1954, %v2035
      %v2052 = vadd.f32 %v1955, %v2036
      %v2053 = vadd.f32 %v1956, %v2037
      %v2054 = vadd.f32 %v1957, %v2038
      %v2055 = vadd.f32 %v1958, %v2039
      %v2056 = vadd.f32 %v1959, %v2040
      %v2057 = vadd.f32 %v1960, %v2041
      %v2058 = vadd.f32 %v1961, %v2042
      %v2059 = vadd.f32 %v1962, %v2043
      %v2060 = vadd.f32 %v1963, %v2044
      %v2061 = vadd.f32 %v1964, %v2045
      %v2062 = vadd.f32 %v1965, %v2046
      %v2063 = vadd.f32 %v1966, %v2047
      %v2064 = vadd.f32 %v1967, %v2048
      %v2065 = vadd.f32 %v1968, %v2049
      %v2066 = vadd.f32 %v1969, %v2050
      %v2067 = vadd.f32 %v1688, %v2051
      %v2068 = vadd.f32 %v1690, %v2052
      %v2069 = vadd.f32 %v1693, %v2053
      %v2070 = vadd.f32 %v1695, %v2054
      %v2071 = vadd.f32 %v1698, %v2055
      %v2072 = vadd.f32 %v1700, %v2056
      %v2073 = vadd.f32 %v1703, %v2057
      %v2074 = vadd.f32 %v1705, %v2058
      %v2075 = vadd.f32 %v1708, %v2059
      %v2076 = vadd.f32 %v1710, %v2060
      %v2077 = vadd.f32 %v1713, %v2061
      %v2078 = vadd.f32 %v1715, %v2062
      %v2079 = vadd.f32 %v1718, %v2063
      %v2080 = vadd.f32 %v1720, %v2064
      %v2081 = vadd.f32 %v1723, %v2065
      %v2082 = vadd.f32 %v1725, %v2066
      %v2083 = vld [vmem:[%s4] sm:$0x1]
      %v2085 = vperm.slane %v2083, 0
      %v2087 = vadd.f32 %v2067, %v2085
      %v2088 = vadd.f32 %v2068, %v2085
      %v2089 = vadd.f32 %v2069, %v2085
      %v2090 = vadd.f32 %v2070, %v2085
      %v2091 = vadd.f32 %v2071, %v2085
      %v2092 = vadd.f32 %v2072, %v2085
      %v2093 = vadd.f32 %v2073, %v2085
      %v2094 = vadd.f32 %v2074, %v2085
      %v2095 = vadd.f32 %v2075, %v2085
      %v2096 = vadd.f32 %v2076, %v2085
      %v2097 = vadd.f32 %v2077, %v2085
      %v2098 = vadd.f32 %v2078, %v2085
      %v2099 = vadd.f32 %v2079, %v2085
      %v2100 = vadd.f32 %v2080, %v2085
      %v2101 = vadd.f32 %v2081, %v2085
      %v2102 = vadd.f32 %v2082, %v2085
      %vm2103 = vcmask 785408
      %2104 = vst.msk [vmem:[%s226] sm:$0xff] %vm2103, %v2087
      %2105 = vst.msk [vmem:[%s226 + $0x8] sm:$0xff] %vm2103, %v2088
      %2106 = vst.msk [vmem:[%s226 + $0x10] sm:$0xff] %vm2103, %v2089
      %2107 = vst.msk [vmem:[%s226 + $0x18] sm:$0xff] %vm2103, %v2090
      %2108 = vst.msk [vmem:[%s226 + $0x20] sm:$0xff] %vm2103, %v2091
      %2109 = vst.msk [vmem:[%s226 + $0x28] sm:$0xff] %vm2103, %v2092
      %2110 = vst.msk [vmem:[%s226 + $0x30] sm:$0xff] %vm2103, %v2093
      %2111 = vst.msk [vmem:[%s226 + $0x38] sm:$0xff] %vm2103, %v2094
      %2112 = vst.msk [vmem:[%s226 + $0x40] sm:$0xff] %vm2103, %v2095
      %2113 = vst.msk [vmem:[%s226 + $0x48] sm:$0xff] %vm2103, %v2096
      %2114 = vst.msk [vmem:[%s226 + $0x50] sm:$0xff] %vm2103, %v2097
      %2115 = vst.msk [vmem:[%s226 + $0x58] sm:$0xff] %vm2103, %v2098
      %2116 = vst.msk [vmem:[%s226 + $0x60] sm:$0xff] %vm2103, %v2099
      %2117 = vst.msk [vmem:[%s226 + $0x68] sm:$0xff] %vm2103, %v2100
      %2118 = vst.msk [vmem:[%s226 + $0x70] sm:$0xff] %vm2103, %v2101
      %2119 = vst.msk [vmem:[%s226 + $0x78] sm:$0xff] %vm2103, %v2102
      %s2120 = smul.u32 16, %s16
      %p2121 = scmp.lt.s32.totalorder %s2120, 31
      %s2122 = scalar_select %p2121, %s2120, 31
      %s2123 = smul.addr %s2122, 8
      %s2124 = scalar_lea.vmem %s5, %s2123
      // Predicated region
      $region41: #{tpu_custom_call.1} parent=39 // pred_check
        %p2125 = pneg %p144
      $region42: #{tpu_custom_call.1} parent=39 // pred_check_branch
        %2127 = sbr.rel (%p2125) target = $region44
      $region43: #{tpu_custom_call.1} parent=39 // pred_region
        %s2128 = smul.u32 16, %s16
      $region44: #{tpu_custom_call.1} parent=39 // pred_fallthru
        _
    $region40: #{tpu_custom_call.1} parent=5 // pred_fallthru
      _
    %p2129 = scmp.le.s32.totalorder 2, %s11
    // Predicated region
    $region45: #{tpu_custom_call.1} parent=5 // pred_check
      %p2130 = pneg %p2129
    $region46: #{tpu_custom_call.1} parent=5 // pred_check_branch
      %2132 = sbr.rel (%p2130) target = $region48
    $region47: #{tpu_custom_call.1} parent=5 // pred_region
      %s2133 = ssub.s32 %s11, 2
      // Predicated region
      $region49: #{tpu_custom_call.1} parent=47 // pred_check
        %p2134 = pneg %p150
      $region50: #{tpu_custom_call.1} parent=47 // pred_check_branch
        %2136 = sbr.rel (%p2134) target = $region52
      $region51: #{tpu_custom_call.1} parent=47 // pred_region
        %s2137 = smul.u32 16, %s17
        %p2138 = scmp.lt.s32.totalorder %s2137, 31
        %s2139 = scalar_select %p2138, %s2137, 31
        %s2140 = smul.addr %s2139, 8
        %s2141 = scalar_lea.vmem %s5, %s2140
      $region52: #{tpu_custom_call.1} parent=47 // pred_fallthru
        _
    $region48: #{tpu_custom_call.1} parent=5 // pred_fallthru
      _
  $region6: #{tpu_custom_call.1} parent=0 // loop_footer
    %s15 = sadd.s32 1, %s11
  $region7: #{tpu_custom_call.1} parent=0 // loop_footer_branch
    %10 = sbr.rel target = $region3
  $region8: #{tpu_custom_call.1} parent=0 // loop_exit
    _

</llo_original>
